<compile_context>
chip_gen: v7x
topology: tpu7x:2x2x1
jax: 0.10.0
libtpu: 0.0.40
codegen_flags: <defaults>
</compile_context>

<pallas_src>
import numpy as np
import jax
import jax.numpy as jnp
from jax import lax
from jax.experimental import pallas as pl
from jax.experimental.pallas import tpu as pltpu


def _round_up(x, m):
    return (x + m - 1) // m * m


# ----------------------------- Pallas kernel ------------------------------ #
def _gru_chunk_kernel(gx_ref, whh_ref, bhh_ref, out_ref, h_scr):
    """One grid step == one (batch-block, time-chunk) tile of the GRU recurrence.

    gx_ref:  (Tc, Bb, 3*Hp)  precomputed input projection x @ W_ih^T + b_ih
    whh_ref: (Hp, 3*Hp)      W_hh^T, zero-padded, gate g at cols [g*Hp, g*Hp+H)
    bhh_ref: (1, 3*Hp)       b_hh, zero-padded (f32)
    out_ref: (Tc, Bb, Hp)    per-timestep hidden states (f32)
    h_scr:   (Bb, Hp)        carried hidden state (persists across time chunks)
    """
    hp = whh_ref.shape[0]
    tc = gx_ref.shape[0]

    @pl.when(pl.program_id(1) == 0)          # first time-chunk of this batch block
    def _():
        h_scr[...] = jnp.zeros_like(h_scr)

    whh = whh_ref[...]                        # kept resident (constant index map)
    bhh = bhh_ref[...].astype(jnp.float32)

    def step(t, h_prev):                      # h_prev carried in f32
        gx_t = gx_ref[t].astype(jnp.float32)  # (Bb, 3*Hp)
        gh = jnp.dot(h_prev.astype(whh.dtype), whh,
                     preferred_element_type=jnp.float32) + bhh
        # PyTorch GRU gate order: reset, update, new
        r = jax.nn.sigmoid(gx_t[:, 0 * hp:1 * hp] + gh[:, 0 * hp:1 * hp])
        z = jax.nn.sigmoid(gx_t[:, 1 * hp:2 * hp] + gh[:, 1 * hp:2 * hp])
        n = jnp.tanh(gx_t[:, 2 * hp:3 * hp] + r * gh[:, 2 * hp:3 * hp])
        h_new = (1.0 - z) * n + z * h_prev
        out_ref[t] = h_new.astype(out_ref.dtype)
        return h_new

    h_scr[...] = lax.fori_loop(0, tc, step, h_scr[...], unroll=True)


# ------------------------------ GRU wrapper -------------------------------- #
def gru_forward_time_major(emb_tbe, w_ih, w_hh, b_ih, b_hh, *,
                           time_chunk=8, compute_dtype=jnp.float32):
    """emb_tbe: [T, B, E] time-major embeddings.
    Returns per-timestep hidden states, time-major: [T, B, H] float32."""
    T, B, E = emb_tbe.shape
    H = w_hh.shape[1]
    Hp = _round_up(H, 128)                 # lane-dense output / gate slabs
    Bp = _round_up(B, 8)                   # sublane-aligned batch
    Tc = max(1, min(time_chunk, T))
    Tp = _round_up(T, Tc)
    f32 = jnp.float32

    # (1) Hoisted input projection: one big matmul outside the recurrence.
    gx = jnp.einsum('tbe,eg->tbg', emb_tbe.astype(f32),
                    jnp.transpose(w_ih).astype(f32),
                    precision=lax.Precision.HIGHEST) + b_ih.astype(f32)   # [T,B,3H]

    # (2) Pad to TPU-friendly shapes; padded lanes stay exactly zero so the
    #     padded part of h remains zero through the recurrence.
    gx_p = jnp.zeros((Tp, Bp, 3, Hp), compute_dtype)
    gx_p = gx_p.at[:T, :B, :, :H].set(gx.reshape(T, B, 3, H).astype(compute_dtype))
    gx_p = gx_p.reshape(Tp, Bp, 3 * Hp)

    whh_p = jnp.zeros((Hp, 3, Hp), compute_dtype)
    whh_p = whh_p.at[:H, :, :H].set(
        jnp.transpose(w_hh).reshape(H, 3, H).astype(compute_dtype))
    whh_p = whh_p.reshape(Hp, 3 * Hp)

    bhh_p = jnp.zeros((1, 3, Hp), f32)
    bhh_p = bhh_p.at[0, :, :H].set(b_hh.reshape(3, H).astype(f32))
    bhh_p = bhh_p.reshape(1, 3 * Hp)

    # One batch block here (Bp is small); for large batches split Bp into
    # multiple blocks so the "parallel" axis shards across v7x's 2 TensorCores.
    Bb = Bp
    grid = (Bp // Bb, Tp // Tc)

    out_p = pl.pallas_call(
        _gru_chunk_kernel,
        out_shape=jax.ShapeDtypeStruct((Tp, Bp, Hp), f32),
        grid_spec=pltpu.PrefetchScalarGridSpec(
            num_scalar_prefetch=0,
            grid=grid,
            in_specs=[
                pl.BlockSpec((Tc, Bb, 3 * Hp), lambda b, t: (t, b, 0)),  # gx chunk
                pl.BlockSpec((Hp, 3 * Hp), lambda b, t: (0, 0)),         # W_hh^T
                pl.BlockSpec((1, 3 * Hp), lambda b, t: (0, 0)),          # b_hh
            ],
            out_specs=pl.BlockSpec((Tc, Bb, Hp), lambda b, t: (t, b, 0)),
            scratch_shapes=[pltpu.VMEM((Bb, Hp), jnp.float32)],          # carried h
        ),
        compiler_params=pltpu.CompilerParams(
            dimension_semantics=("parallel", "arbitrary"),
        ),
    )(gx_p, whh_p, bhh_p)

    return out_p[:T, :B, :H]


# --------------------------- classifier head (glue) ------------------------ #
def _classifier_head(out_tbh, lengths, w_pred, b_pred):
    """last / maxpool / avgpool features + linear predictor (time-major input).
    Emulates pack_padded/pad_packed by zeroing positions t >= length."""
    T, B, H = out_tbh.shape
    mask = (jnp.arange(T)[:, None] < lengths[None, :]).astype(out_tbh.dtype)
    out_masked = out_tbh * mask[..., None]
    last = out_tbh[lengths - 1, jnp.arange(B)]            # [B, H]
    maxpool = jnp.max(out_masked, axis=0)                 # zeros included (F.max_pool1d)
    avgpool = jnp.sum(out_masked, axis=0) / T             # F.avg_pool1d over padded T
    feats = jnp.concatenate([last, maxpool, avgpool], axis=1)   # [B, 3H]
    pred = jnp.dot(feats, w_pred.T, precision=lax.Precision.HIGHEST) + b_pred
    return jnp.squeeze(pred)


def _bce_with_logits(pred, target):
    return jnp.mean(jnp.maximum(pred, 0.0) - pred * target +
                    jnp.log1p(jnp.exp(-jnp.abs(pred))))


# ------------------------------ full model --------------------------------- #
class RNNTextClassifierPallas:
    """RNNTextClassifier, no-attention path: WordRep embedding + 1-layer
    unidirectional GRU (Pallas recurrence) + [last, maxpool, avgpool] features
    + linear predictor + BCEWithLogits loss + sigmoid output."""
    # TODO(synk): attention variants ('dot'/'general'/'labelwise'/'labelembed'),
    # bidirectional / multi-layer / LSTM cells and WordRep's extra feature
    # embeddings are not implemented; pack_padded_sequence is emulated by
    # masking padded timesteps.

    def __init__(self, vocab_size, embed_size, hidden_size, num_labels, key,
                 compute_dtype=jnp.float32, time_chunk=8):
        self.compute_dtype = compute_dtype
        self.time_chunk = time_chunk
        k_emb, k1, k2, k3, k4, k5, k6 = jax.random.split(key, 7)
        bound = 1.0 / np.sqrt(hidden_size)
        self.embedding = jax.random.normal(k_emb, (vocab_size, embed_size),
                                           dtype=jnp.float32) * 0.1
        self.w_ih = jax.random.uniform(k1, (3 * hidden_size, embed_size),
                                       minval=-bound, maxval=bound, dtype=jnp.float32)
        self.w_hh = jax.random.uniform(k2, (3 * hidden_size, hidden_size),
                                       minval=-bound, maxval=bound, dtype=jnp.float32)
        self.b_ih = jax.random.uniform(k3, (3 * hidden_size,),
                                       minval=-bound, maxval=bound, dtype=jnp.float32)
        self.b_hh = jax.random.uniform(k4, (3 * hidden_size,),
                                       minval=-bound, maxval=bound, dtype=jnp.float32)
        pbound = 1.0 / np.sqrt(3 * hidden_size)
        self.w_pred = jax.random.uniform(k5, (num_labels, 3 * hidden_size),
                                         minval=-pbound, maxval=pbound, dtype=jnp.float32)
        self.b_pred = jax.random.uniform(k6, (num_labels,),
                                         minval=-pbound, maxval=pbound, dtype=jnp.float32)

    def __call__(self, x, target, lengths):
        # time-major embedding gather: avoids a [B,T,E] activation transpose
        emb_tbe = jnp.take(self.embedding, x.T, axis=0)            # [T, B, E]
        out_tbh = gru_forward_time_major(emb_tbe, self.w_ih, self.w_hh,
                                         self.b_ih, self.b_hh,
                                         time_chunk=self.time_chunk,
                                         compute_dtype=self.compute_dtype)
        pred = _classifier_head(out_tbh, lengths, self.w_pred, self.b_pred)
        loss = _bce_with_logits(pred, target)
        return {'output': jax.nn.sigmoid(pred), 'loss': loss}


# ------------------------------ reference ---------------------------------- #
def _gru_reference(emb_tbe, w_ih, w_hh, b_ih, b_hh):
    """Pure-JAX GRU (PyTorch semantics), time-major output [T, B, H]."""
    H = w_hh.shape[1]
    B = emb_tbe.shape[1]

    def step(h, x_t):
        gx = jnp.dot(x_t, w_ih.T, precision=lax.Precision.HIGHEST) + b_ih
        gh = jnp.dot(h, w_hh.T, precision=lax.Precision.HIGHEST) + b_hh
        r = jax.nn.sigmoid(gx[:, :H] + gh[:, :H])
        z = jax.nn.sigmoid(gx[:, H:2 * H] + gh[:, H:2 * H])
        n = jnp.tanh(gx[:, 2 * H:] + r * gh[:, 2 * H:])
        h_new = (1.0 - z) * n + z * h
        return h_new, h_new

    h0 = jnp.zeros((B, H), jnp.float32)
    _, outs = jax.lax.scan(step, h0, emb_tbe.astype(jnp.float32))
    return outs


if __name__ == "__main__":
    key = jax.random.PRNGKey(0)
    B, T, E, H, V, L = 2, 16, 16, 32, 50, 5

    k_model, k_inp, k_tgt = jax.random.split(key, 3)
    model = RNNTextClassifierPallas(vocab_size=V, embed_size=E, hidden_size=H,
                                    num_labels=L, key=k_model)

    x = jax.random.randint(k_inp, (B, T), 0, V, dtype=jnp.int32)
    lengths = jnp.array([T, T - 5], dtype=jnp.int32)
    target = (jax.random.uniform(k_tgt, (B, L)) > 0.5).astype(jnp.float32)

    res = model(x, target, lengths)
    y = jax.block_until_ready(res['output'])
    loss = jax.block_until_ready(res['loss'])
    assert y.shape == (B, L)
    assert np.all(np.isfinite(np.asarray(y)))
    assert np.isfinite(float(loss))

    # -------- correctness vs pure-JAX reference (f32 path) --------
    emb_tbe = jnp.take(model.embedding, x.T, axis=0)
    ref_out = _gru_reference(emb_tbe, model.w_ih, model.w_hh, model.b_ih, model.b_hh)
    pal_out = gru_forward_time_major(emb_tbe, model.w_ih, model.w_hh,
                                     model.b_ih, model.b_hh, time_chunk=8)
    np.testing.assert_allclose(np.asarray(pal_out), np.asarray(ref_out),
                               atol=1e-5, rtol=1e-5)

    ref_pred = _classifier_head(ref_out, lengths, model.w_pred, model.b_pred)
    np.testing.assert_allclose(np.asarray(y), np.asarray(jax.nn.sigmoid(ref_pred)),
                               atol=1e-5, rtol=1e-5)
    np.testing.assert_allclose(float(loss), float(_bce_with_logits(ref_pred, target)),
                               atol=1e-5, rtol=1e-5)

    # -------- bf16 weights/activations in the recurrent kernel (loose check) ----
    pal_out_bf16 = gru_forward_time_major(emb_tbe, model.w_ih, model.w_hh,
                                          model.b_ih, model.b_hh,
                                          time_chunk=8, compute_dtype=jnp.bfloat16)
    pal_out_bf16 = jax.block_until_ready(pal_out_bf16)
    np.testing.assert_allclose(np.asarray(pal_out_bf16), np.asarray(ref_out),
                               atol=1e-1, rtol=1e-1)

    print("KERNEL_OK")
</pallas_src>

<mosaic_0001>
module attributes {stable_mosaic.version = 11 : i64} {
  func.func @_gru_chunk_kernel(%arg0: i32, %arg1: i32, %arg2: memref<8x8x384xf32, #tpu.memory_space<vmem>>, %arg3: memref<128x384xf32, #tpu.memory_space<vmem>>, %arg4: memref<1x384xf32, #tpu.memory_space<vmem>>, %arg5: memref<8x8x128xf32, #tpu.memory_space<vmem>>, %arg6: memref<8x128xf32, #tpu.memory_space<vmem>>) attributes {dimension_semantics = [#tpu.dimension_semantics<parallel>, #tpu.dimension_semantics<arbitrary>], iteration_bounds = array<i64: 1, 2>, scalar_prefetch = 0 : i64, scratch_operands = 1 : i64, tpu.core_type = #tpu.core_type<tc>, window_params = [{transform_indices = @transform_0, window_bounds = array<i64: 8, 8, 384>}, {pipeline_mode = #tpu.pipeline_mode<synchronous>, transform_indices = @transform_1, window_bounds = array<i64: 128, 384>}, {pipeline_mode = #tpu.pipeline_mode<synchronous>, transform_indices = @transform_2, window_bounds = array<i64: 1, 384>}, {transform_indices = @transform_3, window_bounds = array<i64: 8, 8, 128>}]} {
    %c0_i32 = arith.constant 0 : i32
    %0 = arith.cmpi eq, %arg1, %c0_i32 : i32
    %1 = arith.extui %0 : i1 to i32
    %c0_i32_0 = arith.constant 0 : i32
    %2 = arith.cmpi ne, %1, %c0_i32_0 : i32
    scf.if %2 {
      %cst_72 = arith.constant 0.000000e+00 : f32
      %295 = vector.broadcast %cst_72 : f32 to vector<8x128xf32>
      %c0_73 = arith.constant 0 : index
      %c0_74 = arith.constant 0 : index
      %296 = vector.load %arg6[%c0_73, %c0_74] : memref<8x128xf32, #tpu.memory_space<vmem>>, vector<8x128xf32>
      tpu.vector_store %arg6[%c0_73, %c0_74], %295 {strides = array<i32>} : memref<8x128xf32, #tpu.memory_space<vmem>>, vector<8x128xf32>,
    } else {
    }
    %c0 = arith.constant 0 : index
    %c0_1 = arith.constant 0 : index
    %3 = vector.load %arg3[%c0, %c0_1] : memref<128x384xf32, #tpu.memory_space<vmem>>, vector<128x384xf32>
    %c0_2 = arith.constant 0 : index
    %c0_3 = arith.constant 0 : index
    %4 = vector.load %arg4[%c0_2, %c0_3] : memref<1x384xf32, #tpu.memory_space<vmem>>, vector<1x384xf32>
    %c0_4 = arith.constant 0 : index
    %c0_5 = arith.constant 0 : index
    %5 = vector.load %arg6[%c0_4, %c0_5] : memref<8x128xf32, #tpu.memory_space<vmem>>, vector<8x128xf32>
    %c0_i32_6 = arith.constant 0 : i32
    %6 = arith.index_cast %c0_i32_6 : i32 to index
    %c0_7 = arith.constant 0 : index
    %c0_8 = arith.constant 0 : index
    %7 = vector.load %arg2[%6, %c0_7, %c0_8] : memref<8x8x384xf32, #tpu.memory_space<vmem>>, vector<1x8x384xf32>
    %8 = vector.shape_cast %7 : vector<1x8x384xf32> to vector<8x384xf32>
    %cst = arith.constant dense<0.000000e+00> : vector<8x384xf32>
    %9 = tpu.matmul %5, %3, %cst {dimension_numbers = #tpu.dot_dimension_numbers<[1], [0], [0], [1], [0, 0, 1, 1], [], []>} : vector<8x128xf32>, vector<128x384xf32>, vector<8x384xf32> -> vector<8x384xf32>
    %10 = vector.broadcast %4 : vector<1x384xf32> to vector<8x384xf32>
    %11 = arith.addf %9, %10 : vector<8x384xf32>
    %12 = vector.extract_strided_slice %8 {offsets = [0, 0], sizes = [8, 128], strides = [1, 1]} : vector<8x384xf32> to vector<8x128xf32>
    %13 = vector.extract_strided_slice %11 {offsets = [0, 0], sizes = [8, 128], strides = [1, 1]} : vector<8x384xf32> to vector<8x128xf32>
    %14 = arith.addf %12, %13 : vector<8x128xf32>
    %15 = arith.negf %14 : vector<8x128xf32>
    %16 = math.exp %15 : vector<8x128xf32>
    %cst_9 = arith.constant 1.000000e+00 : f32
    %17 = vector.broadcast %cst_9 : f32 to vector<8x128xf32>
    %18 = arith.addf %17, %16 : vector<8x128xf32>
    %19 = arith.divf %17, %18 : vector<8x128xf32>
    %20 = vector.extract_strided_slice %8 {offsets = [0, 128], sizes = [8, 128], strides = [1, 1]} : vector<8x384xf32> to vector<8x128xf32>
    %21 = vector.extract_strided_slice %11 {offsets = [0, 128], sizes = [8, 128], strides = [1, 1]} : vector<8x384xf32> to vector<8x128xf32>
    %22 = arith.addf %20, %21 : vector<8x128xf32>
    %23 = arith.negf %22 : vector<8x128xf32>
    %24 = math.exp %23 : vector<8x128xf32>
    %cst_10 = arith.constant 1.000000e+00 : f32
    %25 = vector.broadcast %cst_10 : f32 to vector<8x128xf32>
    %26 = arith.addf %25, %24 : vector<8x128xf32>
    %27 = arith.divf %25, %26 : vector<8x128xf32>
    %28 = vector.extract_strided_slice %8 {offsets = [0, 256], sizes = [8, 128], strides = [1, 1]} : vector<8x384xf32> to vector<8x128xf32>
    %29 = vector.extract_strided_slice %11 {offsets = [0, 256], sizes = [8, 128], strides = [1, 1]} : vector<8x384xf32> to vector<8x128xf32>
    %30 = arith.mulf %19, %29 : vector<8x128xf32>
    %31 = arith.addf %28, %30 : vector<8x128xf32>
    %32 = math.tanh %31 : vector<8x128xf32>
    %cst_11 = arith.constant 1.000000e+00 : f32
    %33 = vector.broadcast %cst_11 : f32 to vector<8x128xf32>
    %34 = arith.subf %33, %27 : vector<8x128xf32>
    %35 = arith.mulf %34, %32 : vector<8x128xf32>
    %36 = arith.mulf %27, %5 : vector<8x128xf32>
    %37 = arith.addf %35, %36 : vector<8x128xf32>
    %38 = arith.index_cast %c0_i32_6 : i32 to index
    %c0_12 = arith.constant 0 : index
    %c0_13 = arith.constant 0 : index
    %39 = vector.load %arg5[%38, %c0_12, %c0_13] : memref<8x8x128xf32, #tpu.memory_space<vmem>>, vector<1x8x128xf32>
    %40 = vector.shape_cast %39 : vector<1x8x128xf32> to vector<8x128xf32>
    %41 = vector.shape_cast %37 : vector<8x128xf32> to vector<1x8x128xf32>
    tpu.vector_store %arg5[%38, %c0_12, %c0_13], %41 {strides = array<i32>} : memref<8x8x128xf32, #tpu.memory_space<vmem>>, vector<1x8x128xf32>,
    %c1_i32 = arith.constant 1 : i32
    %42 = arith.index_cast %c1_i32 : i32 to index
    %c0_14 = arith.constant 0 : index
    %c0_15 = arith.constant 0 : index
    %43 = vector.load %arg2[%42, %c0_14, %c0_15] : memref<8x8x384xf32, #tpu.memory_space<vmem>>, vector<1x8x384xf32>
    %44 = vector.shape_cast %43 : vector<1x8x384xf32> to vector<8x384xf32>
    %cst_16 = arith.constant dense<0.000000e+00> : vector<8x384xf32>
    %45 = tpu.matmul %37, %3, %cst_16 {dimension_numbers = #tpu.dot_dimension_numbers<[1], [0], [0], [1], [0, 0, 1, 1], [], []>} : vector<8x128xf32>, vector<128x384xf32>, vector<8x384xf32> -> vector<8x384xf32>
    %46 = vector.broadcast %4 : vector<1x384xf32> to vector<8x384xf32>
    %47 = arith.addf %45, %46 : vector<8x384xf32>
    %48 = vector.extract_strided_slice %44 {offsets = [0, 0], sizes = [8, 128], strides = [1, 1]} : vector<8x384xf32> to vector<8x128xf32>
    %49 = vector.extract_strided_slice %47 {offsets = [0, 0], sizes = [8, 128], strides = [1, 1]} : vector<8x384xf32> to vector<8x128xf32>
    %50 = arith.addf %48, %49 : vector<8x128xf32>
    %51 = arith.negf %50 : vector<8x128xf32>
    %52 = math.exp %51 : vector<8x128xf32>
    %cst_17 = arith.constant 1.000000e+00 : f32
    %53 = vector.broadcast %cst_17 : f32 to vector<8x128xf32>
    %54 = arith.addf %53, %52 : vector<8x128xf32>
    %55 = arith.divf %53, %54 : vector<8x128xf32>
    %56 = vector.extract_strided_slice %44 {offsets = [0, 128], sizes = [8, 128], strides = [1, 1]} : vector<8x384xf32> to vector<8x128xf32>
    %57 = vector.extract_strided_slice %47 {offsets = [0, 128], sizes = [8, 128], strides = [1, 1]} : vector<8x384xf32> to vector<8x128xf32>
    %58 = arith.addf %56, %57 : vector<8x128xf32>
    %59 = arith.negf %58 : vector<8x128xf32>
    %60 = math.exp %59 : vector<8x128xf32>
    %cst_18 = arith.constant 1.000000e+00 : f32
    %61 = vector.broadcast %cst_18 : f32 to vector<8x128xf32>
    %62 = arith.addf %61, %60 : vector<8x128xf32>
    %63 = arith.divf %61, %62 : vector<8x128xf32>
    %64 = vector.extract_strided_slice %44 {offsets = [0, 256], sizes = [8, 128], strides = [1, 1]} : vector<8x384xf32> to vector<8x128xf32>
    %65 = vector.extract_strided_slice %47 {offsets = [0, 256], sizes = [8, 128], strides = [1, 1]} : vector<8x384xf32> to vector<8x128xf32>
    %66 = arith.mulf %55, %65 : vector<8x128xf32>
    %67 = arith.addf %64, %66 : vector<8x128xf32>
    %68 = math.tanh %67 : vector<8x128xf32>
    %cst_19 = arith.constant 1.000000e+00 : f32
    %69 = vector.broadcast %cst_19 : f32 to vector<8x128xf32>
    %70 = arith.subf %69, %63 : vector<8x128xf32>
    %71 = arith.mulf %70, %68 : vector<8x128xf32>
    %72 = arith.mulf %63, %37 : vector<8x128xf32>
    %73 = arith.addf %71, %72 : vector<8x128xf32>
    %74 = arith.index_cast %c1_i32 : i32 to index
    %c0_20 = arith.constant 0 : index
    %c0_21 = arith.constant 0 : index
    %75 = vector.load %arg5[%74, %c0_20, %c0_21] : memref<8x8x128xf32, #tpu.memory_space<vmem>>, vector<1x8x128xf32>
    %76 = vector.shape_cast %75 : vector<1x8x128xf32> to vector<8x128xf32>
    %77 = vector.shape_cast %73 : vector<8x128xf32> to vector<1x8x128xf32>
    tpu.vector_store %arg5[%74, %c0_20, %c0_21], %77 {strides = array<i32>} : memref<8x8x128xf32, #tpu.memory_space<vmem>>, vector<1x8x128xf32>,
    %c2_i32 = arith.constant 2 : i32
    %78 = arith.index_cast %c2_i32 : i32 to index
    %c0_22 = arith.constant 0 : index
    %c0_23 = arith.constant 0 : index
    %79 = vector.load %arg2[%78, %c0_22, %c0_23] : memref<8x8x384xf32, #tpu.memory_space<vmem>>, vector<1x8x384xf32>
    %80 = vector.shape_cast %79 : vector<1x8x384xf32> to vector<8x384xf32>
    %cst_24 = arith.constant dense<0.000000e+00> : vector<8x384xf32>
    %81 = tpu.matmul %73, %3, %cst_24 {dimension_numbers = #tpu.dot_dimension_numbers<[1], [0], [0], [1], [0, 0, 1, 1], [], []>} : vector<8x128xf32>, vector<128x384xf32>, vector<8x384xf32> -> vector<8x384xf32>
    %82 = vector.broadcast %4 : vector<1x384xf32> to vector<8x384xf32>
    %83 = arith.addf %81, %82 : vector<8x384xf32>
    %84 = vector.extract_strided_slice %80 {offsets = [0, 0], sizes = [8, 128], strides = [1, 1]} : vector<8x384xf32> to vector<8x128xf32>
    %85 = vector.extract_strided_slice %83 {offsets = [0, 0], sizes = [8, 128], strides = [1, 1]} : vector<8x384xf32> to vector<8x128xf32>
    %86 = arith.addf %84, %85 : vector<8x128xf32>
    %87 = arith.negf %86 : vector<8x128xf32>
    %88 = math.exp %87 : vector<8x128xf32>
    %cst_25 = arith.constant 1.000000e+00 : f32
    %89 = vector.broadcast %cst_25 : f32 to vector<8x128xf32>
    %90 = arith.addf %89, %88 : vector<8x128xf32>
    %91 = arith.divf %89, %90 : vector<8x128xf32>
    %92 = vector.extract_strided_slice %80 {offsets = [0, 128], sizes = [8, 128], strides = [1, 1]} : vector<8x384xf32> to vector<8x128xf32>
    %93 = vector.extract_strided_slice %83 {offsets = [0, 128], sizes = [8, 128], strides = [1, 1]} : vector<8x384xf32> to vector<8x128xf32>
    %94 = arith.addf %92, %93 : vector<8x128xf32>
    %95 = arith.negf %94 : vector<8x128xf32>
    %96 = math.exp %95 : vector<8x128xf32>
    %cst_26 = arith.constant 1.000000e+00 : f32
    %97 = vector.broadcast %cst_26 : f32 to vector<8x128xf32>
    %98 = arith.addf %97, %96 : vector<8x128xf32>
    %99 = arith.divf %97, %98 : vector<8x128xf32>
    %100 = vector.extract_strided_slice %80 {offsets = [0, 256], sizes = [8, 128], strides = [1, 1]} : vector<8x384xf32> to vector<8x128xf32>
    %101 = vector.extract_strided_slice %83 {offsets = [0, 256], sizes = [8, 128], strides = [1, 1]} : vector<8x384xf32> to vector<8x128xf32>
    %102 = arith.mulf %91, %101 : vector<8x128xf32>
    %103 = arith.addf %100, %102 : vector<8x128xf32>
    %104 = math.tanh %103 : vector<8x128xf32>
    %cst_27 = arith.constant 1.000000e+00 : f32
    %105 = vector.broadcast %cst_27 : f32 to vector<8x128xf32>
    %106 = arith.subf %105, %99 : vector<8x128xf32>
    %107 = arith.mulf %106, %104 : vector<8x128xf32>
    %108 = arith.mulf %99, %73 : vector<8x128xf32>
    %109 = arith.addf %107, %108 : vector<8x128xf32>
    %110 = arith.index_cast %c2_i32 : i32 to index
    %c0_28 = arith.constant 0 : index
    %c0_29 = arith.constant 0 : index
    %111 = vector.load %arg5[%110, %c0_28, %c0_29] : memref<8x8x128xf32, #tpu.memory_space<vmem>>, vector<1x8x128xf32>
    %112 = vector.shape_cast %111 : vector<1x8x128xf32> to vector<8x128xf32>
    %113 = vector.shape_cast %109 : vector<8x128xf32> to vector<1x8x128xf32>
    tpu.vector_store %arg5[%110, %c0_28, %c0_29], %113 {strides = array<i32>} : memref<8x8x128xf32, #tpu.memory_space<vmem>>, vector<1x8x128xf32>,
    %c3_i32 = arith.constant 3 : i32
    %114 = arith.index_cast %c3_i32 : i32 to index
    %c0_30 = arith.constant 0 : index
    %c0_31 = arith.constant 0 : index
    %115 = vector.load %arg2[%114, %c0_30, %c0_31] : memref<8x8x384xf32, #tpu.memory_space<vmem>>, vector<1x8x384xf32>
    %116 = vector.shape_cast %115 : vector<1x8x384xf32> to vector<8x384xf32>
    %cst_32 = arith.constant dense<0.000000e+00> : vector<8x384xf32>
    %117 = tpu.matmul %109, %3, %cst_32 {dimension_numbers = #tpu.dot_dimension_numbers<[1], [0], [0], [1], [0, 0, 1, 1], [], []>} : vector<8x128xf32>, vector<128x384xf32>, vector<8x384xf32> -> vector<8x384xf32>
    %118 = vector.broadcast %4 : vector<1x384xf32> to vector<8x384xf32>
    %119 = arith.addf %117, %118 : vector<8x384xf32>
    %120 = vector.extract_strided_slice %116 {offsets = [0, 0], sizes = [8, 128], strides = [1, 1]} : vector<8x384xf32> to vector<8x128xf32>
    %121 = vector.extract_strided_slice %119 {offsets = [0, 0], sizes = [8, 128], strides = [1, 1]} : vector<8x384xf32> to vector<8x128xf32>
    %122 = arith.addf %120, %121 : vector<8x128xf32>
    %123 = arith.negf %122 : vector<8x128xf32>
    %124 = math.exp %123 : vector<8x128xf32>
    %cst_33 = arith.constant 1.000000e+00 : f32
    %125 = vector.broadcast %cst_33 : f32 to vector<8x128xf32>
    %126 = arith.addf %125, %124 : vector<8x128xf32>
    %127 = arith.divf %125, %126 : vector<8x128xf32>
    %128 = vector.extract_strided_slice %116 {offsets = [0, 128], sizes = [8, 128], strides = [1, 1]} : vector<8x384xf32> to vector<8x128xf32>
    %129 = vector.extract_strided_slice %119 {offsets = [0, 128], sizes = [8, 128], strides = [1, 1]} : vector<8x384xf32> to vector<8x128xf32>
    %130 = arith.addf %128, %129 : vector<8x128xf32>
    %131 = arith.negf %130 : vector<8x128xf32>
    %132 = math.exp %131 : vector<8x128xf32>
    %cst_34 = arith.constant 1.000000e+00 : f32
    %133 = vector.broadcast %cst_34 : f32 to vector<8x128xf32>
    %134 = arith.addf %133, %132 : vector<8x128xf32>
    %135 = arith.divf %133, %134 : vector<8x128xf32>
    %136 = vector.extract_strided_slice %116 {offsets = [0, 256], sizes = [8, 128], strides = [1, 1]} : vector<8x384xf32> to vector<8x128xf32>
    %137 = vector.extract_strided_slice %119 {offsets = [0, 256], sizes = [8, 128], strides = [1, 1]} : vector<8x384xf32> to vector<8x128xf32>
    %138 = arith.mulf %127, %137 : vector<8x128xf32>
    %139 = arith.addf %136, %138 : vector<8x128xf32>
    %140 = math.tanh %139 : vector<8x128xf32>
    %cst_35 = arith.constant 1.000000e+00 : f32
    %141 = vector.broadcast %cst_35 : f32 to vector<8x128xf32>
    %142 = arith.subf %141, %135 : vector<8x128xf32>
    %143 = arith.mulf %142, %140 : vector<8x128xf32>
    %144 = arith.mulf %135, %109 : vector<8x128xf32>
    %145 = arith.addf %143, %144 : vector<8x128xf32>
    %146 = arith.index_cast %c3_i32 : i32 to index
    %c0_36 = arith.constant 0 : index
    %c0_37 = arith.constant 0 : index
    %147 = vector.load %arg5[%146, %c0_36, %c0_37] : memref<8x8x128xf32, #tpu.memory_space<vmem>>, vector<1x8x128xf32>
    %148 = vector.shape_cast %147 : vector<1x8x128xf32> to vector<8x128xf32>
    %149 = vector.shape_cast %145 : vector<8x128xf32> to vector<1x8x128xf32>
    tpu.vector_store %arg5[%146, %c0_36, %c0_37], %149 {strides = array<i32>} : memref<8x8x128xf32, #tpu.memory_space<vmem>>, vector<1x8x128xf32>,
    %c4_i32 = arith.constant 4 : i32
    %150 = arith.index_cast %c4_i32 : i32 to index
    %c0_38 = arith.constant 0 : index
    %c0_39 = arith.constant 0 : index
    %151 = vector.load %arg2[%150, %c0_38, %c0_39] : memref<8x8x384xf32, #tpu.memory_space<vmem>>, vector<1x8x384xf32>
    %152 = vector.shape_cast %151 : vector<1x8x384xf32> to vector<8x384xf32>
    %cst_40 = arith.constant dense<0.000000e+00> : vector<8x384xf32>
    %153 = tpu.matmul %145, %3, %cst_40 {dimension_numbers = #tpu.dot_dimension_numbers<[1], [0], [0], [1], [0, 0, 1, 1], [], []>} : vector<8x128xf32>, vector<128x384xf32>, vector<8x384xf32> -> vector<8x384xf32>
    %154 = vector.broadcast %4 : vector<1x384xf32> to vector<8x384xf32>
    %155 = arith.addf %153, %154 : vector<8x384xf32>
    %156 = vector.extract_strided_slice %152 {offsets = [0, 0], sizes = [8, 128], strides = [1, 1]} : vector<8x384xf32> to vector<8x128xf32>
    %157 = vector.extract_strided_slice %155 {offsets = [0, 0], sizes = [8, 128], strides = [1, 1]} : vector<8x384xf32> to vector<8x128xf32>
    %158 = arith.addf %156, %157 : vector<8x128xf32>
    %159 = arith.negf %158 : vector<8x128xf32>
    %160 = math.exp %159 : vector<8x128xf32>
    %cst_41 = arith.constant 1.000000e+00 : f32
    %161 = vector.broadcast %cst_41 : f32 to vector<8x128xf32>
    %162 = arith.addf %161, %160 : vector<8x128xf32>
    %163 = arith.divf %161, %162 : vector<8x128xf32>
    %164 = vector.extract_strided_slice %152 {offsets = [0, 128], sizes = [8, 128], strides = [1, 1]} : vector<8x384xf32> to vector<8x128xf32>
    %165 = vector.extract_strided_slice %155 {offsets = [0, 128], sizes = [8, 128], strides = [1, 1]} : vector<8x384xf32> to vector<8x128xf32>
    %166 = arith.addf %164, %165 : vector<8x128xf32>
    %167 = arith.negf %166 : vector<8x128xf32>
    %168 = math.exp %167 : vector<8x128xf32>
    %cst_42 = arith.constant 1.000000e+00 : f32
    %169 = vector.broadcast %cst_42 : f32 to vector<8x128xf32>
    %170 = arith.addf %169, %168 : vector<8x128xf32>
    %171 = arith.divf %169, %170 : vector<8x128xf32>
    %172 = vector.extract_strided_slice %152 {offsets = [0, 256], sizes = [8, 128], strides = [1, 1]} : vector<8x384xf32> to vector<8x128xf32>
    %173 = vector.extract_strided_slice %155 {offsets = [0, 256], sizes = [8, 128], strides = [1, 1]} : vector<8x384xf32> to vector<8x128xf32>
    %174 = arith.mulf %163, %173 : vector<8x128xf32>
    %175 = arith.addf %172, %174 : vector<8x128xf32>
    %176 = math.tanh %175 : vector<8x128xf32>
    %cst_43 = arith.constant 1.000000e+00 : f32
    %177 = vector.broadcast %cst_43 : f32 to vector<8x128xf32>
    %178 = arith.subf %177, %171 : vector<8x128xf32>
    %179 = arith.mulf %178, %176 : vector<8x128xf32>
    %180 = arith.mulf %171, %145 : vector<8x128xf32>
    %181 = arith.addf %179, %180 : vector<8x128xf32>
    %182 = arith.index_cast %c4_i32 : i32 to index
    %c0_44 = arith.constant 0 : index
    %c0_45 = arith.constant 0 : index
    %183 = vector.load %arg5[%182, %c0_44, %c0_45] : memref<8x8x128xf32, #tpu.memory_space<vmem>>, vector<1x8x128xf32>
    %184 = vector.shape_cast %183 : vector<1x8x128xf32> to vector<8x128xf32>
    %185 = vector.shape_cast %181 : vector<8x128xf32> to vector<1x8x128xf32>
    tpu.vector_store %arg5[%182, %c0_44, %c0_45], %185 {strides = array<i32>} : memref<8x8x128xf32, #tpu.memory_space<vmem>>, vector<1x8x128xf32>,
    %c5_i32 = arith.constant 5 : i32
    %186 = arith.index_cast %c5_i32 : i32 to index
    %c0_46 = arith.constant 0 : index
    %c0_47 = arith.constant 0 : index
    %187 = vector.load %arg2[%186, %c0_46, %c0_47] : memref<8x8x384xf32, #tpu.memory_space<vmem>>, vector<1x8x384xf32>
    %188 = vector.shape_cast %187 : vector<1x8x384xf32> to vector<8x384xf32>
    %cst_48 = arith.constant dense<0.000000e+00> : vector<8x384xf32>
    %189 = tpu.matmul %181, %3, %cst_48 {dimension_numbers = #tpu.dot_dimension_numbers<[1], [0], [0], [1], [0, 0, 1, 1], [], []>} : vector<8x128xf32>, vector<128x384xf32>, vector<8x384xf32> -> vector<8x384xf32>
    %190 = vector.broadcast %4 : vector<1x384xf32> to vector<8x384xf32>
    %191 = arith.addf %189, %190 : vector<8x384xf32>
    %192 = vector.extract_strided_slice %188 {offsets = [0, 0], sizes = [8, 128], strides = [1, 1]} : vector<8x384xf32> to vector<8x128xf32>
    %193 = vector.extract_strided_slice %191 {offsets = [0, 0], sizes = [8, 128], strides = [1, 1]} : vector<8x384xf32> to vector<8x128xf32>
    %194 = arith.addf %192, %193 : vector<8x128xf32>
    %195 = arith.negf %194 : vector<8x128xf32>
    %196 = math.exp %195 : vector<8x128xf32>
    %cst_49 = arith.constant 1.000000e+00 : f32
    %197 = vector.broadcast %cst_49 : f32 to vector<8x128xf32>
    %198 = arith.addf %197, %196 : vector<8x128xf32>
    %199 = arith.divf %197, %198 : vector<8x128xf32>
    %200 = vector.extract_strided_slice %188 {offsets = [0, 128], sizes = [8, 128], strides = [1, 1]} : vector<8x384xf32> to vector<8x128xf32>
    %201 = vector.extract_strided_slice %191 {offsets = [0, 128], sizes = [8, 128], strides = [1, 1]} : vector<8x384xf32> to vector<8x128xf32>
    %202 = arith.addf %200, %201 : vector<8x128xf32>
    %203 = arith.negf %202 : vector<8x128xf32>
    %204 = math.exp %203 : vector<8x128xf32>
    %cst_50 = arith.constant 1.000000e+00 : f32
    %205 = vector.broadcast %cst_50 : f32 to vector<8x128xf32>
    %206 = arith.addf %205, %204 : vector<8x128xf32>
    %207 = arith.divf %205, %206 : vector<8x128xf32>
    %208 = vector.extract_strided_slice %188 {offsets = [0, 256], sizes = [8, 128], strides = [1, 1]} : vector<8x384xf32> to vector<8x128xf32>
    %209 = vector.extract_strided_slice %191 {offsets = [0, 256], sizes = [8, 128], strides = [1, 1]} : vector<8x384xf32> to vector<8x128xf32>
    %210 = arith.mulf %199, %209 : vector<8x128xf32>
    %211 = arith.addf %208, %210 : vector<8x128xf32>
    %212 = math.tanh %211 : vector<8x128xf32>
    %cst_51 = arith.constant 1.000000e+00 : f32
    %213 = vector.broadcast %cst_51 : f32 to vector<8x128xf32>
    %214 = arith.subf %213, %207 : vector<8x128xf32>
    %215 = arith.mulf %214, %212 : vector<8x128xf32>
    %216 = arith.mulf %207, %181 : vector<8x128xf32>
    %217 = arith.addf %215, %216 : vector<8x128xf32>
    %218 = arith.index_cast %c5_i32 : i32 to index
    %c0_52 = arith.constant 0 : index
    %c0_53 = arith.constant 0 : index
    %219 = vector.load %arg5[%218, %c0_52, %c0_53] : memref<8x8x128xf32, #tpu.memory_space<vmem>>, vector<1x8x128xf32>
    %220 = vector.shape_cast %219 : vector<1x8x128xf32> to vector<8x128xf32>
    %221 = vector.shape_cast %217 : vector<8x128xf32> to vector<1x8x128xf32>
    tpu.vector_store %arg5[%218, %c0_52, %c0_53], %221 {strides = array<i32>} : memref<8x8x128xf32, #tpu.memory_space<vmem>>, vector<1x8x128xf32>,
    %c6_i32 = arith.constant 6 : i32
    %222 = arith.index_cast %c6_i32 : i32 to index
    %c0_54 = arith.constant 0 : index
    %c0_55 = arith.constant 0 : index
    %223 = vector.load %arg2[%222, %c0_54, %c0_55] : memref<8x8x384xf32, #tpu.memory_space<vmem>>, vector<1x8x384xf32>
    %224 = vector.shape_cast %223 : vector<1x8x384xf32> to vector<8x384xf32>
    %cst_56 = arith.constant dense<0.000000e+00> : vector<8x384xf32>
    %225 = tpu.matmul %217, %3, %cst_56 {dimension_numbers = #tpu.dot_dimension_numbers<[1], [0], [0], [1], [0, 0, 1, 1], [], []>} : vector<8x128xf32>, vector<128x384xf32>, vector<8x384xf32> -> vector<8x384xf32>
    %226 = vector.broadcast %4 : vector<1x384xf32> to vector<8x384xf32>
    %227 = arith.addf %225, %226 : vector<8x384xf32>
    %228 = vector.extract_strided_slice %224 {offsets = [0, 0], sizes = [8, 128], strides = [1, 1]} : vector<8x384xf32> to vector<8x128xf32>
    %229 = vector.extract_strided_slice %227 {offsets = [0, 0], sizes = [8, 128], strides = [1, 1]} : vector<8x384xf32> to vector<8x128xf32>
    %230 = arith.addf %228, %229 : vector<8x128xf32>
    %231 = arith.negf %230 : vector<8x128xf32>
    %232 = math.exp %231 : vector<8x128xf32>
    %cst_57 = arith.constant 1.000000e+00 : f32
    %233 = vector.broadcast %cst_57 : f32 to vector<8x128xf32>
    %234 = arith.addf %233, %232 : vector<8x128xf32>
    %235 = arith.divf %233, %234 : vector<8x128xf32>
    %236 = vector.extract_strided_slice %224 {offsets = [0, 128], sizes = [8, 128], strides = [1, 1]} : vector<8x384xf32> to vector<8x128xf32>
    %237 = vector.extract_strided_slice %227 {offsets = [0, 128], sizes = [8, 128], strides = [1, 1]} : vector<8x384xf32> to vector<8x128xf32>
    %238 = arith.addf %236, %237 : vector<8x128xf32>
    %239 = arith.negf %238 : vector<8x128xf32>
    %240 = math.exp %239 : vector<8x128xf32>
    %cst_58 = arith.constant 1.000000e+00 : f32
    %241 = vector.broadcast %cst_58 : f32 to vector<8x128xf32>
    %242 = arith.addf %241, %240 : vector<8x128xf32>
    %243 = arith.divf %241, %242 : vector<8x128xf32>
    %244 = vector.extract_strided_slice %224 {offsets = [0, 256], sizes = [8, 128], strides = [1, 1]} : vector<8x384xf32> to vector<8x128xf32>
    %245 = vector.extract_strided_slice %227 {offsets = [0, 256], sizes = [8, 128], strides = [1, 1]} : vector<8x384xf32> to vector<8x128xf32>
    %246 = arith.mulf %235, %245 : vector<8x128xf32>
    %247 = arith.addf %244, %246 : vector<8x128xf32>
    %248 = math.tanh %247 : vector<8x128xf32>
    %cst_59 = arith.constant 1.000000e+00 : f32
    %249 = vector.broadcast %cst_59 : f32 to vector<8x128xf32>
    %250 = arith.subf %249, %243 : vector<8x128xf32>
    %251 = arith.mulf %250, %248 : vector<8x128xf32>
    %252 = arith.mulf %243, %217 : vector<8x128xf32>
    %253 = arith.addf %251, %252 : vector<8x128xf32>
    %254 = arith.index_cast %c6_i32 : i32 to index
    %c0_60 = arith.constant 0 : index
    %c0_61 = arith.constant 0 : index
    %255 = vector.load %arg5[%254, %c0_60, %c0_61] : memref<8x8x128xf32, #tpu.memory_space<vmem>>, vector<1x8x128xf32>
    %256 = vector.shape_cast %255 : vector<1x8x128xf32> to vector<8x128xf32>
    %257 = vector.shape_cast %253 : vector<8x128xf32> to vector<1x8x128xf32>
    tpu.vector_store %arg5[%254, %c0_60, %c0_61], %257 {strides = array<i32>} : memref<8x8x128xf32, #tpu.memory_space<vmem>>, vector<1x8x128xf32>,
    %c7_i32 = arith.constant 7 : i32
    %258 = arith.index_cast %c7_i32 : i32 to index
    %c0_62 = arith.constant 0 : index
    %c0_63 = arith.constant 0 : index
    %259 = vector.load %arg2[%258, %c0_62, %c0_63] : memref<8x8x384xf32, #tpu.memory_space<vmem>>, vector<1x8x384xf32>
    %260 = vector.shape_cast %259 : vector<1x8x384xf32> to vector<8x384xf32>
    %cst_64 = arith.constant dense<0.000000e+00> : vector<8x384xf32>
    %261 = tpu.matmul %253, %3, %cst_64 {dimension_numbers = #tpu.dot_dimension_numbers<[1], [0], [0], [1], [0, 0, 1, 1], [], []>} : vector<8x128xf32>, vector<128x384xf32>, vector<8x384xf32> -> vector<8x384xf32>
    %262 = vector.broadcast %4 : vector<1x384xf32> to vector<8x384xf32>
    %263 = arith.addf %261, %262 : vector<8x384xf32>
    %264 = vector.extract_strided_slice %260 {offsets = [0, 0], sizes = [8, 128], strides = [1, 1]} : vector<8x384xf32> to vector<8x128xf32>
    %265 = vector.extract_strided_slice %263 {offsets = [0, 0], sizes = [8, 128], strides = [1, 1]} : vector<8x384xf32> to vector<8x128xf32>
    %266 = arith.addf %264, %265 : vector<8x128xf32>
    %267 = arith.negf %266 : vector<8x128xf32>
    %268 = math.exp %267 : vector<8x128xf32>
    %cst_65 = arith.constant 1.000000e+00 : f32
    %269 = vector.broadcast %cst_65 : f32 to vector<8x128xf32>
    %270 = arith.addf %269, %268 : vector<8x128xf32>
    %271 = arith.divf %269, %270 : vector<8x128xf32>
    %272 = vector.extract_strided_slice %260 {offsets = [0, 128], sizes = [8, 128], strides = [1, 1]} : vector<8x384xf32> to vector<8x128xf32>
    %273 = vector.extract_strided_slice %263 {offsets = [0, 128], sizes = [8, 128], strides = [1, 1]} : vector<8x384xf32> to vector<8x128xf32>
    %274 = arith.addf %272, %273 : vector<8x128xf32>
    %275 = arith.negf %274 : vector<8x128xf32>
    %276 = math.exp %275 : vector<8x128xf32>
    %cst_66 = arith.constant 1.000000e+00 : f32
    %277 = vector.broadcast %cst_66 : f32 to vector<8x128xf32>
    %278 = arith.addf %277, %276 : vector<8x128xf32>
    %279 = arith.divf %277, %278 : vector<8x128xf32>
    %280 = vector.extract_strided_slice %260 {offsets = [0, 256], sizes = [8, 128], strides = [1, 1]} : vector<8x384xf32> to vector<8x128xf32>
    %281 = vector.extract_strided_slice %263 {offsets = [0, 256], sizes = [8, 128], strides = [1, 1]} : vector<8x384xf32> to vector<8x128xf32>
    %282 = arith.mulf %271, %281 : vector<8x128xf32>
    %283 = arith.addf %280, %282 : vector<8x128xf32>
    %284 = math.tanh %283 : vector<8x128xf32>
    %cst_67 = arith.constant 1.000000e+00 : f32
    %285 = vector.broadcast %cst_67 : f32 to vector<8x128xf32>
    %286 = arith.subf %285, %279 : vector<8x128xf32>
    %287 = arith.mulf %286, %284 : vector<8x128xf32>
    %288 = arith.mulf %279, %253 : vector<8x128xf32>
    %289 = arith.addf %287, %288 : vector<8x128xf32>
    %290 = arith.index_cast %c7_i32 : i32 to index
    %c0_68 = arith.constant 0 : index
    %c0_69 = arith.constant 0 : index
    %291 = vector.load %arg5[%290, %c0_68, %c0_69] : memref<8x8x128xf32, #tpu.memory_space<vmem>>, vector<1x8x128xf32>
    %292 = vector.shape_cast %291 : vector<1x8x128xf32> to vector<8x128xf32>
    %293 = vector.shape_cast %289 : vector<8x128xf32> to vector<1x8x128xf32>
    tpu.vector_store %arg5[%290, %c0_68, %c0_69], %293 {strides = array<i32>} : memref<8x8x128xf32, #tpu.memory_space<vmem>>, vector<1x8x128xf32>,
    %c8_i32 = arith.constant 8 : i32
    %c0_70 = arith.constant 0 : index
    %c0_71 = arith.constant 0 : index
    %294 = vector.load %arg6[%c0_70, %c0_71] : memref<8x128xf32, #tpu.memory_space<vmem>>, vector<8x128xf32>
    tpu.vector_store %arg6[%c0_70, %c0_71], %289 {strides = array<i32>} : memref<8x128xf32, #tpu.memory_space<vmem>>, vector<8x128xf32>,
    return
  }
  func.func @transform_0(%arg0: i32, %arg1: i32) -> (i32, i32, i32) {
    %c0_i32 = arith.constant 0 : i32
    %c0_i32_0 = arith.constant 0 : i32
    return %arg1, %arg0, %c0_i32 : i32, i32, i32
  }
  func.func @transform_1(%arg0: i32, %arg1: i32) -> (i32, i32) {
    %c0_i32 = arith.constant 0 : i32
    %c0_i32_0 = arith.constant 0 : i32
    %c0_i32_1 = arith.constant 0 : i32
    return %c0_i32, %c0_i32_0 : i32, i32
  }
  func.func @transform_2(%arg0: i32, %arg1: i32) -> (i32, i32) {
    %c0_i32 = arith.constant 0 : i32
    %c0_i32_0 = arith.constant 0 : i32
    %c0_i32_1 = arith.constant 0 : i32
    return %c0_i32, %c0_i32_0 : i32, i32
  }
  func.func @transform_3(%arg0: i32, %arg1: i32) -> (i32, i32, i32) {
    %c0_i32 = arith.constant 0 : i32
    %c0_i32_0 = arith.constant 0 : i32
    return %arg1, %arg0, %c0_i32 : i32, i32, i32
  }
}

</mosaic_0001>

<llo_original>
// kernel: tpu_custom_call.1
$region0: #{tpu_custom_call.1}
  #allocation0 [shape = 'u32[]', space=smem, size = 0x4, offset = 0x4, fixed_abs, tag = 'smem constant byte address 0x4 - core index']
  #allocation1 [shape = 'u32[144,128]{1,0:T(1,128)}', space=vmem, size = 0x12000, scoped, tag = 'internal scratch']
  #allocation2 [shape = 'f32[8,128]{1,0:T(8,128)}', space=vmem, size = 0x1000, scoped, tag = 'scratch operand']
  %s0 = inlined_call_operand.hbm [shape: f32[16,8,384], index: 0, kind: input, shape index: {}]
  %s1 = inlined_call_operand.hbm [shape: f32[128,384], index: 1, kind: input, shape index: {}]
  %s2 = inlined_call_operand.vmem [shape: f32[1,384], index: 2, kind: input, shape index: {}]
  %s3 = inlined_call_operand.hbm [shape: f32[16,8,128], index: 3, kind: output, shape index: {}]
  %s4 = sld [smem:[#allocation0]]
  $region57: #{tpu_custom_call.1} parent=0
    _
  %s6 = ssub.s32 1, %s4
  %s7 = scalar_select 0, %s6, %s4
  $region1: #{tpu_custom_call.1} parent=0
    #allocation3 [shape = 'u8[196608]{0}', space=vmem, size = 0x30000, scoped, tag = 'input window, operand 0']
    #allocation4 [shape = 's32[2]{0}', space=sflag, size = 0x8, scoped, tag = 'scoped memory for tpu_custom_call.1']
    #allocation5 [shape = 's32[2]{0}', space=sflag, size = 0x8, scoped, tag = 'scoped memory for tpu_custom_call.1']
    #allocation6 [shape = 'u8[196608]{0}', space=vmem, size = 0x30000, scoped, tag = 'input window, operand 1, single buffered']
    #allocation7 [shape = 's32[1]{0}', space=sflag, size = 0x4, scoped, tag = 'scoped memory for tpu_custom_call.1']
    #allocation8 [shape = 'u8[65536]{0}', space=vmem, size = 0x10000, scoped, tag = 'output window, operand 0']
    %8 = vsyncpa [#allocation4], 0
    %s9 = scalar_lea.sflag [#allocation4], 1
    %10 = vsyncpa %s9, 0
    %11 = vsyncpa [#allocation7], 0
    %12 = vsyncpa [#allocation5], 0
    %s13 = scalar_lea.sflag [#allocation5], 1
    %14 = vsyncpa %s13, 0
    loop: start=0, step=1, limit=4
    $region2: #{tpu_custom_call.1} parent=1 // loop_pre_header
      _
    $region3: #{tpu_custom_call.1} parent=1 // loop_header
      %s16 = sphi 0, %s20
      %p17 = scmp.ge.s32.totalorder %s16, 4
      %s23 = sphi 0, %s35
      %s24 = sphi 0, %s31
      %s25 = sphi 0, %s23
      %s26 = sphi 0, %s24
      %s27 = sphi 0, %s25
      %s28 = sphi 0, %s26
      %s40 = sphi 0, %s42
      %s43 = sphi 0, %s40
      %s44 = sphi 0, %s43
      %s60 = sphi 0, %s44
      %s64 = sphi 0, %s64
      %s66 = sphi 0, %s64
      %s67 = sphi 0, %s66
      %s81 = sphi 0, %s67
      %s85 = sphi 0, %s85
      %s87 = sphi 0, %s85
      %s88 = sphi 0, %s87
      %s102 = sphi 0, %s88
      %s110 = sphi 0, %s112
      %s113 = sphi 0, %s110
      %s114 = sphi 0, %s113
      %s130 = sphi 0, %s114
    $region4: #{tpu_custom_call.1} parent=1 // loop_header_branch
      %19 = sbr.rel (%p17) target = $region8
    $region5: #{tpu_custom_call.1} parent=1 // loop_body
      %s21 = ssub.s32 %s16, 1
      %s22 = ssub.s32 %s16, 2
      %s29 = sadd.s32 1, %s24
      %p30 = scmp.ge.s32.totalorder %s29, 2
      %s31 = scalar_select %p30, 0, %s29
      %s32 = sadd.s32 1, %s23
      %s33 = scalar_select %p30, %s32, %s23
      %p34 = scmp.ge.s32.totalorder %s33, 1
      %s35 = scalar_select %p34, 0, %s33
      %s36 = ssub.s32 %s24, %s31
      %s37 = ssub.s32 %s23, %s35
      %s38 = sor.u32 %s36, %s37
      %p39 = scmp.eq.s32.totalorder %s38, 0
      %s41 = sadd.s32 %s40, 1
      %s42 = scalar_select %p39, %s40, %s41
      %p45 = pneg %p39
      %p46 = scmp.eq.s32.totalorder %s16, 1
      %p47 = por %p45, %p46
      %p48 = scmp.ne.s32.totalorder %s40, %s43
      %p49 = scmp.eq.s32.totalorder %s16, 0
      %p50 = por %p48, %p49
      %p51 = scmp.ne.s32.totalorder %s40, %s43
      %p52 = scmp.eq.s32.totalorder %s21, 1
      %p53 = por %p51, %p52
      %p54 = scmp.ne.s32.totalorder %s43, %s44
      %p55 = scmp.eq.s32.totalorder %s21, 0
      %p56 = por %p54, %p55
      %p57 = scmp.ne.s32.totalorder %s43, %s44
      %p58 = scmp.eq.s32.totalorder %s22, 1
      %p59 = por %p57, %p58
      %p61 = scmp.ne.s32.totalorder %s44, %s60
      %p62 = scmp.eq.s32.totalorder %s22, 0
      %p63 = por %p61, %p62
      %s65 = sadd.s32 %s64, 1
      %p68 = scmp.eq.s32.totalorder %s16, 1
      %p69 = scmp.ne.s32.totalorder %s64, %s66
      %p70 = scmp.eq.s32.totalorder %s16, 0
      %p71 = por %p69, %p70
      %p72 = scmp.ne.s32.totalorder %s64, %s66
      %p73 = scmp.eq.s32.totalorder %s21, 1
      %p74 = por %p72, %p73
      %p75 = scmp.ne.s32.totalorder %s66, %s67
      %p76 = scmp.eq.s32.totalorder %s21, 0
      %p77 = por %p75, %p76
      %p78 = scmp.ne.s32.totalorder %s66, %s67
      %p79 = scmp.eq.s32.totalorder %s22, 1
      %p80 = por %p78, %p79
      %p82 = scmp.ne.s32.totalorder %s67, %s81
      %p83 = scmp.eq.s32.totalorder %s22, 0
      %p84 = por %p82, %p83
      %s86 = sadd.s32 %s85, 1
      %p89 = scmp.eq.s32.totalorder %s16, 1
      %p90 = scmp.ne.s32.totalorder %s85, %s87
      %p91 = scmp.eq.s32.totalorder %s16, 0
      %p92 = por %p90, %p91
      %p93 = scmp.ne.s32.totalorder %s85, %s87
      %p94 = scmp.eq.s32.totalorder %s21, 1
      %p95 = por %p93, %p94
      %p96 = scmp.ne.s32.totalorder %s87, %s88
      %p97 = scmp.eq.s32.totalorder %s21, 0
      %p98 = por %p96, %p97
      %p99 = scmp.ne.s32.totalorder %s87, %s88
      %p100 = scmp.eq.s32.totalorder %s22, 1
      %p101 = por %p99, %p100
      %p103 = scmp.ne.s32.totalorder %s88, %s102
      %p104 = scmp.eq.s32.totalorder %s22, 0
      %p105 = por %p103, %p104
      %s106 = ssub.s32 %s24, %s31
      %s107 = ssub.s32 %s23, %s35
      %s108 = sor.u32 %s106, %s107
      %p109 = scmp.eq.s32.totalorder %s108, 0
      %s111 = sadd.s32 %s110, 1
      %s112 = scalar_select %p109, %s110, %s111
      %p115 = pneg %p109
      %p116 = scmp.eq.s32.totalorder %s16, 1
      %p117 = por %p115, %p116
      %p118 = scmp.ne.s32.totalorder %s110, %s113
      %p119 = scmp.eq.s32.totalorder %s16, 0
      %p120 = por %p118, %p119
      %p121 = scmp.ne.s32.totalorder %s110, %s113
      %p122 = scmp.eq.s32.totalorder %s21, 1
      %p123 = por %p121, %p122
      %p124 = scmp.ne.s32.totalorder %s113, %s114
      %p125 = scmp.eq.s32.totalorder %s21, 0
      %p126 = por %p124, %p125
      %p127 = scmp.ne.s32.totalorder %s113, %s114
      %p128 = scmp.eq.s32.totalorder %s22, 1
      %p129 = por %p127, %p128
      %p131 = scmp.ne.s32.totalorder %s114, %s130
      %p132 = scmp.eq.s32.totalorder %s22, 0
      %p133 = por %p131, %p132
      %p134 = scmp.le.s32.totalorder 1, %s16
      %p135 = scmp.lt.s32.totalorder %s16, 3
      %p136 = pnand %p134, %p135
      %p137 = pneg %p136
      // Predicated region
      $region9: #{tpu_custom_call.1} parent=5 // pred_check
        _
      $region10: #{tpu_custom_call.1} parent=5 // pred_check_branch
        %139 = sbr.rel (%p136) target = $region12
      $region11: #{tpu_custom_call.1} parent=5 // pred_region
        %s140 = ssub.s32 %s16, 1
        // Predicated region
        $region13: #{tpu_custom_call.1} parent=11 // pred_check
          %p141 = pneg %p77
        $region14: #{tpu_custom_call.1} parent=11 // pred_check_branch
          %143 = sbr.rel (%p141) target = $region16
        $region15: #{tpu_custom_call.1} parent=11 // pred_region
          %s145 = ssub.s32 6144, 6144
          %146 = vsyncadd [#allocation7], %s145
          %s147 = sshll.u32 [#allocation6], 4
          %s148 = int_to_ptr.vmem [resolvable:$true] %s147
          %153 = dma.hbm_to_vmem [thread:$0]  %s1, 6144, %s148, [#allocation7], 384, 384, 24
        $region16: #{tpu_custom_call.1} parent=11 // pred_fallthru
          _
        // Predicated region
        $region17: #{tpu_custom_call.1} parent=11 // pred_check
          %p154 = pneg %p98
        $region18: #{tpu_custom_call.1} parent=11 // pred_check_branch
          %156 = sbr.rel (%p154) target = $region20
        $region19: #{tpu_custom_call.1} parent=11 // pred_region
          _
        $region20: #{tpu_custom_call.1} parent=11 // pred_fallthru
          _
      $region12: #{tpu_custom_call.1} parent=5 // pred_fallthru
        _
      %p157 = scmp.lt.s32.totalorder %s16, 2
      // Predicated region
      $region21: #{tpu_custom_call.1} parent=5 // pred_check
        %p158 = pneg %p157
      $region22: #{tpu_custom_call.1} parent=5 // pred_check_branch
        %160 = sbr.rel (%p158) target = $region24
      $region23: #{tpu_custom_call.1} parent=5 // pred_region
        // Predicated region
        $region25: #{tpu_custom_call.1} parent=23 // pred_check
          %p161 = pneg %p50
        $region26: #{tpu_custom_call.1} parent=23 // pred_check_branch
          %163 = sbr.rel (%p161) target = $region28
        $region27: #{tpu_custom_call.1} parent=23 // pred_region
          %s164 = sand.u32 %s40, 1
          %s165 = scalar_lea.sflag [#allocation4], %s164
          %s166 = sand.u32 %s40, 1
          %s167 = smul.addr %s166, 192
          %s168 = scalar_lea.vmem [#allocation3], %s167
          %s169 = smul.u32 8, %s24
          %s171 = ssub.s32 3072, 3072
          %172 = vsyncadd %s165, %s171
          %s173 = smul.addr %s23, 3
          %s174 = smul.addr %s169, 3
          %s175 = sadd.s32 %s173, %s174
          %s176 = smul.addr %s175, 128
          %s177 = scalar_lea.hbm %s0, %s176
          %s178 = sshll.u32 %s168, 4
          %s179 = int_to_ptr.vmem [resolvable:$true] %s178
          %184 = dma.hbm_to_vmem [thread:$0]  %s177, 3072, %s179, %s165, 384, 384, 24
        $region28: #{tpu_custom_call.1} parent=23 // pred_fallthru
          _
      $region24: #{tpu_custom_call.1} parent=5 // pred_fallthru
        _
      %p185 = scmp.le.s32.totalorder 1, %s16
      %p186 = scmp.lt.s32.totalorder %s16, 3
      %p187 = pnand %p185, %p186
      %p188 = pneg %p187
      // Predicated region
      $region29: #{tpu_custom_call.1} parent=5 // pred_check
        _
      $region30: #{tpu_custom_call.1} parent=5 // pred_check_branch
        %190 = sbr.rel (%p187) target = $region32
      $region31: #{tpu_custom_call.1} parent=5 // pred_region
        %s191 = ssub.s32 %s16, 1
        %s192 = sand.u32 %s43, 1
        %s193 = scalar_lea.sflag [#allocation4], %s192
        %s194 = sand.u32 %s43, 1
        %s195 = smul.addr %s194, 192
        %s196 = scalar_lea.vmem [#allocation3], %s195
        // Predicated region
        $region33: #{tpu_custom_call.1} parent=31 // pred_check
          %p197 = pneg %p56
        $region34: #{tpu_custom_call.1} parent=31 // pred_check_branch
          %199 = sbr.rel (%p197) target = $region36
        $region35: #{tpu_custom_call.1} parent=31 // pred_region
          %200 = dma.done %s193, 3072
        $region36: #{tpu_custom_call.1} parent=31 // pred_fallthru
          _
        // Predicated region
        $region37: #{tpu_custom_call.1} parent=31 // pred_check
          %p201 = pneg %p77
        $region38: #{tpu_custom_call.1} parent=31 // pred_check_branch
          %203 = sbr.rel (%p201) target = $region40
        $region39: #{tpu_custom_call.1} parent=31 // pred_region
          %204 = dma.done [#allocation7], 6144
        $region40: #{tpu_custom_call.1} parent=31 // pred_fallthru
          _
        %s205 = sand.u32 %s43, 1
        %s206 = scalar_lea.sflag [#allocation4], %s205
        %s207 = sand.u32 %s43, 1
        %s208 = smul.addr %s207, 192
        %s209 = scalar_lea.vmem [#allocation3], %s208
        %p210 = pneg %p56
        %p211 = pneg %p53
        %p212 = pneg %p77
        %p213 = pneg %p74
        %p214 = pneg %p98
        %p215 = pneg %p95
        %p216 = pneg %p126
        %p217 = pneg %p123
        %s218 = sand.u32 %s113, 1
        %s219 = scalar_lea.sflag [#allocation5], %s218
        %s220 = sand.u32 %s113, 1
        %s221 = smul.addr %s220, 64
        %s222 = scalar_lea.vmem [#allocation8], %s221
        %s223 = smul.u32 8, %s26
        %s224 = smul.u32 8, %s26
        %p225 = scmp.eq.s32.totalorder %s26, 0
        // Predicated region
        $region41: #{tpu_custom_call.1} parent=31 // pred_check
          %p226 = pneg %p225
        $region42: #{tpu_custom_call.1} parent=31 // pred_check_branch
          %228 = sbr.rel (%p226) target = $region44
        $region43: #{tpu_custom_call.1} parent=31 // pred_region
          %229 = vst [vmem:[#allocation2] sm:$0xff] 0.0
        $region44: #{tpu_custom_call.1} parent=31 // pred_fallthru
          _
        %v230 = vld [vmem:[#allocation6] sm:$0xff]
        %v231 = vld [vmem:[#allocation6 + $0x8] sm:$0xff]
        %v232 = vld [vmem:[#allocation6 + $0x10] sm:$0xff]
        %v233 = vld [vmem:[#allocation6 + $0x18] sm:$0xff]
        %v234 = vld [vmem:[#allocation6 + $0x20] sm:$0xff]
        %v235 = vld [vmem:[#allocation6 + $0x28] sm:$0xff]
        %v236 = vld [vmem:[#allocation6 + $0x30] sm:$0xff]
        %v237 = vld [vmem:[#allocation6 + $0x38] sm:$0xff]
        %v238 = vld [vmem:[#allocation6 + $0x40] sm:$0xff]
        %v239 = vld [vmem:[#allocation6 + $0x48] sm:$0xff]
        %v240 = vld [vmem:[#allocation6 + $0x50] sm:$0xff]
        %v241 = vld [vmem:[#allocation6 + $0x58] sm:$0xff]
        %v242 = vld [vmem:[#allocation6 + $0x60] sm:$0xff]
        %v243 = vld [vmem:[#allocation6 + $0x68] sm:$0xff]
        %v244 = vld [vmem:[#allocation6 + $0x70] sm:$0xff]
        %v245 = vld [vmem:[#allocation6 + $0x78] sm:$0xff]
        %v246 = vld [vmem:[#allocation6 + $0x80] sm:$0xff]
        %v247 = vld [vmem:[#allocation6 + $0x88] sm:$0xff]
        %v248 = vld [vmem:[#allocation6 + $0x90] sm:$0xff]
        %v249 = vld [vmem:[#allocation6 + $0x98] sm:$0xff]
        %v250 = vld [vmem:[#allocation6 + $0xa0] sm:$0xff]
        %v251 = vld [vmem:[#allocation6 + $0xa8] sm:$0xff]
        %v252 = vld [vmem:[#allocation6 + $0xb0] sm:$0xff]
        %v253 = vld [vmem:[#allocation6 + $0xb8] sm:$0xff]
        %v254 = vld [vmem:[#allocation6 + $0xc0] sm:$0xff]
        %v255 = vld [vmem:[#allocation6 + $0xc8] sm:$0xff]
        %v256 = vld [vmem:[#allocation6 + $0xd0] sm:$0xff]
        %v257 = vld [vmem:[#allocation6 + $0xd8] sm:$0xff]
        %v258 = vld [vmem:[#allocation6 + $0xe0] sm:$0xff]
        %v259 = vld [vmem:[#allocation6 + $0xe8] sm:$0xff]
        %v260 = vld [vmem:[#allocation6 + $0xf0] sm:$0xff]
        %v261 = vld [vmem:[#allocation6 + $0xf8] sm:$0xff]
        %v262 = vld [vmem:[#allocation6 + $0x100] sm:$0xff]
        %v263 = vld [vmem:[#allocation6 + $0x108] sm:$0xff]
        %v264 = vld [vmem:[#allocation6 + $0x110] sm:$0xff]
        %v265 = vld [vmem:[#allocation6 + $0x118] sm:$0xff]
        %v266 = vld [vmem:[#allocation6 + $0x120] sm:$0xff]
        %v267 = vld [vmem:[#allocation6 + $0x128] sm:$0xff]
        %v268 = vld [vmem:[#allocation6 + $0x130] sm:$0xff]
        %v269 = vld [vmem:[#allocation6 + $0x138] sm:$0xff]
        %v270 = vld [vmem:[#allocation6 + $0x140] sm:$0xff]
        %v271 = vld [vmem:[#allocation6 + $0x148] sm:$0xff]
        %v272 = vld [vmem:[#allocation6 + $0x150] sm:$0xff]
        %v273 = vld [vmem:[#allocation6 + $0x158] sm:$0xff]
        %v274 = vld [vmem:[#allocation6 + $0x160] sm:$0xff]
        %v275 = vld [vmem:[#allocation6 + $0x168] sm:$0xff]
        %v276 = vld [vmem:[#allocation6 + $0x170] sm:$0xff]
        %v277 = vld [vmem:[#allocation6 + $0x178] sm:$0xff]
        %v278 = vld [vmem:[%s2] sm:$0x7]
        %v279 = vld [vmem:[#allocation2] sm:$0xff]
        %v280 = vld [vmem:[%s196] sm:$0xff]
        %v281 = vld [vmem:[%s196 + $0x8] sm:$0xff]
        %v282 = vld [vmem:[%s196 + $0x10] sm:$0xff]
        %v284 = vlaneseq
        %v285 = vshrl.u32 %v284, 7
        %v286 = vsub.s32 0, %v285
        %v287 = vrot.slane %v278, %v286
        %v288 = vlaneseq
        %v289 = vshrl.u32 %v288, 7
        %v290 = vsub.s32 1, %v289
        %v291 = vrot.slane %v278, %v290
        %v292 = vlaneseq
        %v293 = vshrl.u32 %v292, 7
        %v294 = vsub.s32 2, %v293
        %v295 = vrot.slane %v278, %v294
        %299 = vmatprep.subr.mxu0 %v231
        %300 = vmatpush1.msra.mxu0 %v230
        %301 = vmatprep.subr.mxu0 %v234
        %302 = vmatpush1.msra.mxu0 %v233
        %303 = vmatprep.subr.mxu0 %v237
        %304 = vmatpush1.msra.mxu0 %v236
        %305 = vmatprep.subr.mxu0 %v240
        %306 = vmatpush1.msra.mxu0 %v239
        %307 = vmatprep.subr.mxu0 %v243
        %308 = vmatpush1.msra.mxu0 %v242
        %309 = vmatprep.subr.mxu0 %v246
        %310 = vmatpush1.msra.mxu0 %v245
        %311 = vmatprep.subr.mxu0 %v249
        %312 = vmatpush1.msra.mxu0 %v248
        %313 = vmatprep.subr.mxu0 %v252
        %314 = vmatpush1.msra.mxu0 %v251
        %315 = vmatprep.subr.mxu0 %v255
        %316 = vmatpush1.msra.mxu0 %v254
        %317 = vmatprep.subr.mxu0 %v258
        %318 = vmatpush1.msra.mxu0 %v257
        %319 = vmatprep.subr.mxu0 %v261
        %320 = vmatpush1.msra.mxu0 %v260
        %321 = vmatprep.subr.mxu0 %v264
        %322 = vmatpush1.msra.mxu0 %v263
        %323 = vmatprep.subr.mxu0 %v267
        %324 = vmatpush1.msra.mxu0 %v266
        %325 = vmatprep.subr.mxu0 %v270
        %326 = vmatpush1.msra.mxu0 %v269
        %327 = vmatprep.subr.mxu0 %v273
        %328 = vmatpush1.msra.mxu0 %v272
        %329 = vmatprep.subr.mxu0 %v276
        %330 = vmatpush1.msra.mxu0 %v275
        %331 = vmatprep.subr.mxu0 0.0
        %332 = vmatpush1.msra.mxu0 0.0
        %333 = vmatprep.subr.mxu0 0.0
        %334 = vmatpush1.msra.mxu0 0.0
        %335 = vmatprep.subr.mxu0 0.0
        %336 = vmatpush1.msra.mxu0 0.0
        %337 = vmatprep.subr.mxu0 0.0
        %338 = vmatpush1.msra.mxu0 0.0
        %339 = vmatprep.subr.mxu0 0.0
        %340 = vmatpush1.msra.mxu0 0.0
        %341 = vmatprep.subr.mxu0 0.0
        %342 = vmatpush1.msra.mxu0 0.0
        %343 = vmatprep.subr.mxu0 0.0
        %344 = vmatpush1.msra.mxu0 0.0
        %345 = vmatprep.subr.mxu0 0.0
        %346 = vmatpush1.msra.mxu0 0.0
        %347 = vmatprep.subr.mxu0 0.0
        %348 = vmatpush1.msra.mxu0 0.0
        %349 = vmatprep.subr.mxu0 0.0
        %350 = vmatpush1.msra.mxu0 0.0
        %351 = vmatprep.subr.mxu0 0.0
        %352 = vmatpush1.msra.mxu0 0.0
        %353 = vmatprep.subr.mxu0 0.0
        %354 = vmatpush1.msra.mxu0 0.0
        %355 = vmatprep.subr.mxu0 0.0
        %356 = vmatpush1.msra.mxu0 0.0
        %357 = vmatprep.subr.mxu0 0.0
        %358 = vmatpush1.msra.mxu0 0.0
        %359 = vmatprep.subr.mxu0 0.0
        %360 = vmatpush1.msra.mxu0 0.0
        %361 = vmatprep.subr.mxu0 0.0
        %362 = vmatpush1.msra.mxu0 0.0
        %363 = vmatprep.mubr.f32.mxu0 0.0
        %364 = vmatmul.mubr.f32.gmra.mrb[0].mxu0 %v279
        %v365 = vpop.f32.mrb[0].mxu0
        %v366 = vadd.f32 %v287, %v365
        %v367 = vpop.f32.mrb[0].mxu0
        %v368 = vadd.f32 %v291, %v367
        %369 = vdwg.mxu0
        %370 = vmatprep.subr.mxu0 0.0
        %371 = vmatpush1.msra.mxu0 %v232
        %372 = vmatprep.subr.mxu0 0.0
        %373 = vmatpush1.msra.mxu0 %v235
        %374 = vmatprep.subr.mxu0 0.0
        %375 = vmatpush1.msra.mxu0 %v238
        %376 = vmatprep.subr.mxu0 0.0
        %377 = vmatpush1.msra.mxu0 %v241
        %378 = vmatprep.subr.mxu0 0.0
        %379 = vmatpush1.msra.mxu0 %v244
        %380 = vmatprep.subr.mxu0 0.0
        %381 = vmatpush1.msra.mxu0 %v247
        %382 = vmatprep.subr.mxu0 0.0
        %383 = vmatpush1.msra.mxu0 %v250
        %384 = vmatprep.subr.mxu0 0.0
        %385 = vmatpush1.msra.mxu0 %v253
        %386 = vmatprep.subr.mxu0 0.0
        %387 = vmatpush1.msra.mxu0 %v256
        %388 = vmatprep.subr.mxu0 0.0
        %389 = vmatpush1.msra.mxu0 %v259
        %390 = vmatprep.subr.mxu0 0.0
        %391 = vmatpush1.msra.mxu0 %v262
        %392 = vmatprep.subr.mxu0 0.0
        %393 = vmatpush1.msra.mxu0 %v265
        %394 = vmatprep.subr.mxu0 0.0
        %395 = vmatpush1.msra.mxu0 %v268
        %396 = vmatprep.subr.mxu0 0.0
        %397 = vmatpush1.msra.mxu0 %v271
        %398 = vmatprep.subr.mxu0 0.0
        %399 = vmatpush1.msra.mxu0 %v274
        %400 = vmatprep.subr.mxu0 0.0
        %401 = vmatpush1.msra.mxu0 %v277
        %402 = vmatprep.subr.mxu0 0.0
        %403 = vmatpush1.msra.mxu0 0.0
        %404 = vmatprep.subr.mxu0 0.0
        %405 = vmatpush1.msra.mxu0 0.0
        %406 = vmatprep.subr.mxu0 0.0
        %407 = vmatpush1.msra.mxu0 0.0
        %408 = vmatprep.subr.mxu0 0.0
        %409 = vmatpush1.msra.mxu0 0.0
        %410 = vmatprep.subr.mxu0 0.0
        %411 = vmatpush1.msra.mxu0 0.0
        %412 = vmatprep.subr.mxu0 0.0
        %413 = vmatpush1.msra.mxu0 0.0
        %414 = vmatprep.subr.mxu0 0.0
        %415 = vmatpush1.msra.mxu0 0.0
        %416 = vmatprep.subr.mxu0 0.0
        %417 = vmatpush1.msra.mxu0 0.0
        %418 = vmatprep.subr.mxu0 0.0
        %419 = vmatpush1.msra.mxu0 0.0
        %420 = vmatprep.subr.mxu0 0.0
        %421 = vmatpush1.msra.mxu0 0.0
        %422 = vmatprep.subr.mxu0 0.0
        %423 = vmatpush1.msra.mxu0 0.0
        %424 = vmatprep.subr.mxu0 0.0
        %425 = vmatpush1.msra.mxu0 0.0
        %426 = vmatprep.subr.mxu0 0.0
        %427 = vmatpush1.msra.mxu0 0.0
        %428 = vmatprep.subr.mxu0 0.0
        %429 = vmatpush1.msra.mxu0 0.0
        %430 = vmatprep.subr.mxu0 0.0
        %431 = vmatpush1.msra.mxu0 0.0
        %432 = vmatprep.subr.mxu0 0.0
        %433 = vmatpush1.msra.mxu0 0.0
        %434 = vmatprep.mubr.f32.mxu0 0.0
        %435 = vmatmul.mubr.f32.gmra.mrb[0].mxu0 %v279
        %v436 = vpop.f32.mrb[0].mxu0
        %v437 = vadd.f32 %v295, %v436
        %v438 = vpop.f32.mrb[0].mxu0
        %439 = vdwg.mxu0
        %v440 = vadd.f32 %v280, %v366
        %v441 = vxor.u32 %v440, 2147483648
        %v442 = vmul.f32 %v441, 1.442695
        %v443 = vpow.pop %v442
        %v444 = vadd.f32 %v443, 1.0
        %v445 = vrcp.pop %v444
        %v446 = vmul.f32 1.0, %v445
        %v447 = vadd.f32 %v281, %v368
        %v448 = vxor.u32 %v447, 2147483648
        %v449 = vmul.f32 %v448, 1.442695
        %v450 = vpow.pop %v449
        %v451 = vadd.f32 %v450, 1.0
        %v452 = vrcp.pop %v451
        %v453 = vmul.f32 1.0, %v452
        %v454 = vmul.f32 %v446, %v437
        %v455 = vadd.f32 %v282, %v454
        %v456 = vtanh.pop %v455
        %v457 = vsub.f32 1.0, %v453
        %v458 = vmul.f32 %v457, %v456
        %v459 = vmul.f32 %v453, %v279
        %v460 = vadd.f32 %v458, %v459
        %461 = vst [vmem:[%s222] sm:$0xff] %v460
        %s462 = scalar_lea.vmem %s196, 24 [#allocation3]
        %v463 = vld [vmem:[%s462] sm:$0xff]
        %v464 = vld [vmem:[%s462 + $0x8] sm:$0xff]
        %v465 = vld [vmem:[%s462 + $0x10] sm:$0xff]
        %466 = vmatprep.subr.mxu0 %v231
        %467 = vmatpush1.msra.mxu0 %v230
        %468 = vmatprep.subr.mxu0 %v234
        %469 = vmatpush1.msra.mxu0 %v233
        %470 = vmatprep.subr.mxu0 %v237
        %471 = vmatpush1.msra.mxu0 %v236
        %472 = vmatprep.subr.mxu0 %v240
        %473 = vmatpush1.msra.mxu0 %v239
        %474 = vmatprep.subr.mxu0 %v243
        %475 = vmatpush1.msra.mxu0 %v242
        %476 = vmatprep.subr.mxu0 %v246
        %477 = vmatpush1.msra.mxu0 %v245
        %478 = vmatprep.subr.mxu0 %v249
        %479 = vmatpush1.msra.mxu0 %v248
        %480 = vmatprep.subr.mxu0 %v252
        %481 = vmatpush1.msra.mxu0 %v251
        %482 = vmatprep.subr.mxu0 %v255
        %483 = vmatpush1.msra.mxu0 %v254
        %484 = vmatprep.subr.mxu0 %v258
        %485 = vmatpush1.msra.mxu0 %v257
        %486 = vmatprep.subr.mxu0 %v261
        %487 = vmatpush1.msra.mxu0 %v260
        %488 = vmatprep.subr.mxu0 %v264
        %489 = vmatpush1.msra.mxu0 %v263
        %490 = vmatprep.subr.mxu0 %v267
        %491 = vmatpush1.msra.mxu0 %v266
        %492 = vmatprep.subr.mxu0 %v270
        %493 = vmatpush1.msra.mxu0 %v269
        %494 = vmatprep.subr.mxu0 %v273
        %495 = vmatpush1.msra.mxu0 %v272
        %496 = vmatprep.subr.mxu0 %v276
        %497 = vmatpush1.msra.mxu0 %v275
        %498 = vmatprep.subr.mxu0 0.0
        %499 = vmatpush1.msra.mxu0 0.0
        %500 = vmatprep.subr.mxu0 0.0
        %501 = vmatpush1.msra.mxu0 0.0
        %502 = vmatprep.subr.mxu0 0.0
        %503 = vmatpush1.msra.mxu0 0.0
        %504 = vmatprep.subr.mxu0 0.0
        %505 = vmatpush1.msra.mxu0 0.0
        %506 = vmatprep.subr.mxu0 0.0
        %507 = vmatpush1.msra.mxu0 0.0
        %508 = vmatprep.subr.mxu0 0.0
        %509 = vmatpush1.msra.mxu0 0.0
        %510 = vmatprep.subr.mxu0 0.0
        %511 = vmatpush1.msra.mxu0 0.0
        %512 = vmatprep.subr.mxu0 0.0
        %513 = vmatpush1.msra.mxu0 0.0
        %514 = vmatprep.subr.mxu0 0.0
        %515 = vmatpush1.msra.mxu0 0.0
        %516 = vmatprep.subr.mxu0 0.0
        %517 = vmatpush1.msra.mxu0 0.0
        %518 = vmatprep.subr.mxu0 0.0
        %519 = vmatpush1.msra.mxu0 0.0
        %520 = vmatprep.subr.mxu0 0.0
        %521 = vmatpush1.msra.mxu0 0.0
        %522 = vmatprep.subr.mxu0 0.0
        %523 = vmatpush1.msra.mxu0 0.0
        %524 = vmatprep.subr.mxu0 0.0
        %525 = vmatpush1.msra.mxu0 0.0
        %526 = vmatprep.subr.mxu0 0.0
        %527 = vmatpush1.msra.mxu0 0.0
        %528 = vmatprep.subr.mxu0 0.0
        %529 = vmatpush1.msra.mxu0 0.0
        %530 = vmatprep.mubr.f32.mxu0 0.0
        %531 = vmatmul.mubr.f32.gmra.mrb[0].mxu0 %v460
        %v532 = vpop.f32.mrb[0].mxu0
        %v533 = vadd.f32 %v287, %v532
        %v534 = vpop.f32.mrb[0].mxu0
        %v535 = vadd.f32 %v291, %v534
        %536 = vdwg.mxu0
        %537 = vmatprep.subr.mxu0 0.0
        %538 = vmatpush1.msra.mxu0 %v232
        %539 = vmatprep.subr.mxu0 0.0
        %540 = vmatpush1.msra.mxu0 %v235
        %541 = vmatprep.subr.mxu0 0.0
        %542 = vmatpush1.msra.mxu0 %v238
        %543 = vmatprep.subr.mxu0 0.0
        %544 = vmatpush1.msra.mxu0 %v241
        %545 = vmatprep.subr.mxu0 0.0
        %546 = vmatpush1.msra.mxu0 %v244
        %547 = vmatprep.subr.mxu0 0.0
        %548 = vmatpush1.msra.mxu0 %v247
        %549 = vmatprep.subr.mxu0 0.0
        %550 = vmatpush1.msra.mxu0 %v250
        %551 = vmatprep.subr.mxu0 0.0
        %552 = vmatpush1.msra.mxu0 %v253
        %553 = vmatprep.subr.mxu0 0.0
        %554 = vmatpush1.msra.mxu0 %v256
        %555 = vmatprep.subr.mxu0 0.0
        %556 = vmatpush1.msra.mxu0 %v259
        %557 = vmatprep.subr.mxu0 0.0
        %558 = vmatpush1.msra.mxu0 %v262
        %559 = vmatprep.subr.mxu0 0.0
        %560 = vmatpush1.msra.mxu0 %v265
        %561 = vmatprep.subr.mxu0 0.0
        %562 = vmatpush1.msra.mxu0 %v268
        %563 = vmatprep.subr.mxu0 0.0
        %564 = vmatpush1.msra.mxu0 %v271
        %565 = vmatprep.subr.mxu0 0.0
        %566 = vmatpush1.msra.mxu0 %v274
        %567 = vmatprep.subr.mxu0 0.0
        %568 = vmatpush1.msra.mxu0 %v277
        %569 = vmatprep.subr.mxu0 0.0
        %570 = vmatpush1.msra.mxu0 0.0
        %571 = vmatprep.subr.mxu0 0.0
        %572 = vmatpush1.msra.mxu0 0.0
        %573 = vmatprep.subr.mxu0 0.0
        %574 = vmatpush1.msra.mxu0 0.0
        %575 = vmatprep.subr.mxu0 0.0
        %576 = vmatpush1.msra.mxu0 0.0
        %577 = vmatprep.subr.mxu0 0.0
        %578 = vmatpush1.msra.mxu0 0.0
        %579 = vmatprep.subr.mxu0 0.0
        %580 = vmatpush1.msra.mxu0 0.0
        %581 = vmatprep.subr.mxu0 0.0
        %582 = vmatpush1.msra.mxu0 0.0
        %583 = vmatprep.subr.mxu0 0.0
        %584 = vmatpush1.msra.mxu0 0.0
        %585 = vmatprep.subr.mxu0 0.0
        %586 = vmatpush1.msra.mxu0 0.0
        %587 = vmatprep.subr.mxu0 0.0
        %588 = vmatpush1.msra.mxu0 0.0
        %589 = vmatprep.subr.mxu0 0.0
        %590 = vmatpush1.msra.mxu0 0.0
        %591 = vmatprep.subr.mxu0 0.0
        %592 = vmatpush1.msra.mxu0 0.0
        %593 = vmatprep.subr.mxu0 0.0
        %594 = vmatpush1.msra.mxu0 0.0
        %595 = vmatprep.subr.mxu0 0.0
        %596 = vmatpush1.msra.mxu0 0.0
        %597 = vmatprep.subr.mxu0 0.0
        %598 = vmatpush1.msra.mxu0 0.0
        %599 = vmatprep.subr.mxu0 0.0
        %600 = vmatpush1.msra.mxu0 0.0
        %601 = vmatprep.mubr.f32.mxu0 0.0
        %602 = vmatmul.mubr.f32.gmra.mrb[0].mxu0 %v460
        %v603 = vpop.f32.mrb[0].mxu0
        %v604 = vadd.f32 %v295, %v603
        %v605 = vpop.f32.mrb[0].mxu0
        %606 = vdwg.mxu0
        %v607 = vadd.f32 %v463, %v533
        %v608 = vxor.u32 %v607, 2147483648
        %v609 = vmul.f32 %v608, 1.442695
        %v610 = vpow.pop %v609
        %v611 = vadd.f32 %v610, 1.0
        %v612 = vrcp.pop %v611
        %v613 = vmul.f32 1.0, %v612
        %v614 = vadd.f32 %v464, %v535
        %v615 = vxor.u32 %v614, 2147483648
        %v616 = vmul.f32 %v615, 1.442695
        %v617 = vpow.pop %v616
        %v618 = vadd.f32 %v617, 1.0
        %v619 = vrcp.pop %v618
        %v620 = vmul.f32 1.0, %v619
        %v621 = vmul.f32 %v613, %v604
        %v622 = vadd.f32 %v465, %v621
        %v623 = vtanh.pop %v622
        %v624 = vsub.f32 1.0, %v620
        %v625 = vmul.f32 %v624, %v623
        %v626 = vmul.f32 %v620, %v460
        %v627 = vadd.f32 %v625, %v626
        %s628 = scalar_lea.vmem %s222, 8 [#allocation8]
        %629 = vst [vmem:[%s628] sm:$0xff] %v627
        %s630 = scalar_lea.vmem %s196, 48 [#allocation3]
        %v631 = vld [vmem:[%s630] sm:$0xff]
        %v632 = vld [vmem:[%s630 + $0x8] sm:$0xff]
        %v633 = vld [vmem:[%s630 + $0x10] sm:$0xff]
        %634 = vmatprep.subr.mxu0 %v231
        %635 = vmatpush1.msra.mxu0 %v230
        %636 = vmatprep.subr.mxu0 %v234
        %637 = vmatpush1.msra.mxu0 %v233
        %638 = vmatprep.subr.mxu0 %v237
        %639 = vmatpush1.msra.mxu0 %v236
        %640 = vmatprep.subr.mxu0 %v240
        %641 = vmatpush1.msra.mxu0 %v239
        %642 = vmatprep.subr.mxu0 %v243
        %643 = vmatpush1.msra.mxu0 %v242
        %644 = vmatprep.subr.mxu0 %v246
        %645 = vmatpush1.msra.mxu0 %v245
        %646 = vmatprep.subr.mxu0 %v249
        %647 = vmatpush1.msra.mxu0 %v248
        %648 = vmatprep.subr.mxu0 %v252
        %649 = vmatpush1.msra.mxu0 %v251
        %650 = vmatprep.subr.mxu0 %v255
        %651 = vmatpush1.msra.mxu0 %v254
        %652 = vmatprep.subr.mxu0 %v258
        %653 = vmatpush1.msra.mxu0 %v257
        %654 = vmatprep.subr.mxu0 %v261
        %655 = vmatpush1.msra.mxu0 %v260
        %656 = vmatprep.subr.mxu0 %v264
        %657 = vmatpush1.msra.mxu0 %v263
        %658 = vmatprep.subr.mxu0 %v267
        %659 = vmatpush1.msra.mxu0 %v266
        %660 = vmatprep.subr.mxu0 %v270
        %661 = vmatpush1.msra.mxu0 %v269
        %662 = vmatprep.subr.mxu0 %v273
        %663 = vmatpush1.msra.mxu0 %v272
        %664 = vmatprep.subr.mxu0 %v276
        %665 = vmatpush1.msra.mxu0 %v275
        %666 = vmatprep.subr.mxu0 0.0
        %667 = vmatpush1.msra.mxu0 0.0
        %668 = vmatprep.subr.mxu0 0.0
        %669 = vmatpush1.msra.mxu0 0.0
        %670 = vmatprep.subr.mxu0 0.0
        %671 = vmatpush1.msra.mxu0 0.0
        %672 = vmatprep.subr.mxu0 0.0
        %673 = vmatpush1.msra.mxu0 0.0
        %674 = vmatprep.subr.mxu0 0.0
        %675 = vmatpush1.msra.mxu0 0.0
        %676 = vmatprep.subr.mxu0 0.0
        %677 = vmatpush1.msra.mxu0 0.0
        %678 = vmatprep.subr.mxu0 0.0
        %679 = vmatpush1.msra.mxu0 0.0
        %680 = vmatprep.subr.mxu0 0.0
        %681 = vmatpush1.msra.mxu0 0.0
        %682 = vmatprep.subr.mxu0 0.0
        %683 = vmatpush1.msra.mxu0 0.0
        %684 = vmatprep.subr.mxu0 0.0
        %685 = vmatpush1.msra.mxu0 0.0
        %686 = vmatprep.subr.mxu0 0.0
        %687 = vmatpush1.msra.mxu0 0.0
        %688 = vmatprep.subr.mxu0 0.0
        %689 = vmatpush1.msra.mxu0 0.0
        %690 = vmatprep.subr.mxu0 0.0
        %691 = vmatpush1.msra.mxu0 0.0
        %692 = vmatprep.subr.mxu0 0.0
        %693 = vmatpush1.msra.mxu0 0.0
        %694 = vmatprep.subr.mxu0 0.0
        %695 = vmatpush1.msra.mxu0 0.0
        %696 = vmatprep.subr.mxu0 0.0
        %697 = vmatpush1.msra.mxu0 0.0
        %698 = vmatprep.mubr.f32.mxu0 0.0
        %699 = vmatmul.mubr.f32.gmra.mrb[0].mxu0 %v627
        %v700 = vpop.f32.mrb[0].mxu0
        %v701 = vadd.f32 %v287, %v700
        %v702 = vpop.f32.mrb[0].mxu0
        %v703 = vadd.f32 %v291, %v702
        %704 = vdwg.mxu0
        %705 = vmatprep.subr.mxu0 0.0
        %706 = vmatpush1.msra.mxu0 %v232
        %707 = vmatprep.subr.mxu0 0.0
        %708 = vmatpush1.msra.mxu0 %v235
        %709 = vmatprep.subr.mxu0 0.0
        %710 = vmatpush1.msra.mxu0 %v238
        %711 = vmatprep.subr.mxu0 0.0
        %712 = vmatpush1.msra.mxu0 %v241
        %713 = vmatprep.subr.mxu0 0.0
        %714 = vmatpush1.msra.mxu0 %v244
        %715 = vmatprep.subr.mxu0 0.0
        %716 = vmatpush1.msra.mxu0 %v247
        %717 = vmatprep.subr.mxu0 0.0
        %718 = vmatpush1.msra.mxu0 %v250
        %719 = vmatprep.subr.mxu0 0.0
        %720 = vmatpush1.msra.mxu0 %v253
        %721 = vmatprep.subr.mxu0 0.0
        %722 = vmatpush1.msra.mxu0 %v256
        %723 = vmatprep.subr.mxu0 0.0
        %724 = vmatpush1.msra.mxu0 %v259
        %725 = vmatprep.subr.mxu0 0.0
        %726 = vmatpush1.msra.mxu0 %v262
        %727 = vmatprep.subr.mxu0 0.0
        %728 = vmatpush1.msra.mxu0 %v265
        %729 = vmatprep.subr.mxu0 0.0
        %730 = vmatpush1.msra.mxu0 %v268
        %731 = vmatprep.subr.mxu0 0.0
        %732 = vmatpush1.msra.mxu0 %v271
        %733 = vmatprep.subr.mxu0 0.0
        %734 = vmatpush1.msra.mxu0 %v274
        %735 = vmatprep.subr.mxu0 0.0
        %736 = vmatpush1.msra.mxu0 %v277
        %737 = vmatprep.subr.mxu0 0.0
        %738 = vmatpush1.msra.mxu0 0.0
        %739 = vmatprep.subr.mxu0 0.0
        %740 = vmatpush1.msra.mxu0 0.0
        %741 = vmatprep.subr.mxu0 0.0
        %742 = vmatpush1.msra.mxu0 0.0
        %743 = vmatprep.subr.mxu0 0.0
        %744 = vmatpush1.msra.mxu0 0.0
        %745 = vmatprep.subr.mxu0 0.0
        %746 = vmatpush1.msra.mxu0 0.0
        %747 = vmatprep.subr.mxu0 0.0
        %748 = vmatpush1.msra.mxu0 0.0
        %749 = vmatprep.subr.mxu0 0.0
        %750 = vmatpush1.msra.mxu0 0.0
        %751 = vmatprep.subr.mxu0 0.0
        %752 = vmatpush1.msra.mxu0 0.0
        %753 = vmatprep.subr.mxu0 0.0
        %754 = vmatpush1.msra.mxu0 0.0
        %755 = vmatprep.subr.mxu0 0.0
        %756 = vmatpush1.msra.mxu0 0.0
        %757 = vmatprep.subr.mxu0 0.0
        %758 = vmatpush1.msra.mxu0 0.0
        %759 = vmatprep.subr.mxu0 0.0
        %760 = vmatpush1.msra.mxu0 0.0
        %761 = vmatprep.subr.mxu0 0.0
        %762 = vmatpush1.msra.mxu0 0.0
        %763 = vmatprep.subr.mxu0 0.0
        %764 = vmatpush1.msra.mxu0 0.0
        %765 = vmatprep.subr.mxu0 0.0
        %766 = vmatpush1.msra.mxu0 0.0
        %767 = vmatprep.subr.mxu0 0.0
        %768 = vmatpush1.msra.mxu0 0.0
        %769 = vmatprep.mubr.f32.mxu0 0.0
        %770 = vmatmul.mubr.f32.gmra.mrb[0].mxu0 %v627
        %v771 = vpop.f32.mrb[0].mxu0
        %v772 = vadd.f32 %v295, %v771
        %v773 = vpop.f32.mrb[0].mxu0
        %774 = vdwg.mxu0
        %v775 = vadd.f32 %v631, %v701
        %v776 = vxor.u32 %v775, 2147483648
        %v777 = vmul.f32 %v776, 1.442695
        %v778 = vpow.pop %v777
        %v779 = vadd.f32 %v778, 1.0
        %v780 = vrcp.pop %v779
        %v781 = vmul.f32 1.0, %v780
        %v782 = vadd.f32 %v632, %v703
        %v783 = vxor.u32 %v782, 2147483648
        %v784 = vmul.f32 %v783, 1.442695
        %v785 = vpow.pop %v784
        %v786 = vadd.f32 %v785, 1.0
        %v787 = vrcp.pop %v786
        %v788 = vmul.f32 1.0, %v787
        %v789 = vmul.f32 %v781, %v772
        %v790 = vadd.f32 %v633, %v789
        %v791 = vtanh.pop %v790
        %v792 = vsub.f32 1.0, %v788
        %v793 = vmul.f32 %v792, %v791
        %v794 = vmul.f32 %v788, %v627
        %v795 = vadd.f32 %v793, %v794
        %s796 = scalar_lea.vmem %s222, 16 [#allocation8]
        %797 = vst [vmem:[%s796] sm:$0xff] %v795
        %s798 = scalar_lea.vmem %s196, 72 [#allocation3]
        %v799 = vld [vmem:[%s798] sm:$0xff]
        %v800 = vld [vmem:[%s798 + $0x8] sm:$0xff]
        %v801 = vld [vmem:[%s798 + $0x10] sm:$0xff]
        %802 = vmatprep.subr.mxu0 %v231
        %803 = vmatpush1.msra.mxu0 %v230
        %804 = vmatprep.subr.mxu0 %v234
        %805 = vmatpush1.msra.mxu0 %v233
        %806 = vmatprep.subr.mxu0 %v237
        %807 = vmatpush1.msra.mxu0 %v236
        %808 = vmatprep.subr.mxu0 %v240
        %809 = vmatpush1.msra.mxu0 %v239
        %810 = vmatprep.subr.mxu0 %v243
        %811 = vmatpush1.msra.mxu0 %v242
        %812 = vmatprep.subr.mxu0 %v246
        %813 = vmatpush1.msra.mxu0 %v245
        %814 = vmatprep.subr.mxu0 %v249
        %815 = vmatpush1.msra.mxu0 %v248
        %816 = vmatprep.subr.mxu0 %v252
        %817 = vmatpush1.msra.mxu0 %v251
        %818 = vmatprep.subr.mxu0 %v255
        %819 = vmatpush1.msra.mxu0 %v254
        %820 = vmatprep.subr.mxu0 %v258
        %821 = vmatpush1.msra.mxu0 %v257
        %822 = vmatprep.subr.mxu0 %v261
        %823 = vmatpush1.msra.mxu0 %v260
        %824 = vmatprep.subr.mxu0 %v264
        %825 = vmatpush1.msra.mxu0 %v263
        %826 = vmatprep.subr.mxu0 %v267
        %827 = vmatpush1.msra.mxu0 %v266
        %828 = vmatprep.subr.mxu0 %v270
        %829 = vmatpush1.msra.mxu0 %v269
        %830 = vmatprep.subr.mxu0 %v273
        %831 = vmatpush1.msra.mxu0 %v272
        %832 = vmatprep.subr.mxu0 %v276
        %833 = vmatpush1.msra.mxu0 %v275
        %834 = vmatprep.subr.mxu0 0.0
        %835 = vmatpush1.msra.mxu0 0.0
        %836 = vmatprep.subr.mxu0 0.0
        %837 = vmatpush1.msra.mxu0 0.0
        %838 = vmatprep.subr.mxu0 0.0
        %839 = vmatpush1.msra.mxu0 0.0
        %840 = vmatprep.subr.mxu0 0.0
        %841 = vmatpush1.msra.mxu0 0.0
        %842 = vmatprep.subr.mxu0 0.0
        %843 = vmatpush1.msra.mxu0 0.0
        %844 = vmatprep.subr.mxu0 0.0
        %845 = vmatpush1.msra.mxu0 0.0
        %846 = vmatprep.subr.mxu0 0.0
        %847 = vmatpush1.msra.mxu0 0.0
        %848 = vmatprep.subr.mxu0 0.0
        %849 = vmatpush1.msra.mxu0 0.0
        %850 = vmatprep.subr.mxu0 0.0
        %851 = vmatpush1.msra.mxu0 0.0
        %852 = vmatprep.subr.mxu0 0.0
        %853 = vmatpush1.msra.mxu0 0.0
        %854 = vmatprep.subr.mxu0 0.0
        %855 = vmatpush1.msra.mxu0 0.0
        %856 = vmatprep.subr.mxu0 0.0
        %857 = vmatpush1.msra.mxu0 0.0
        %858 = vmatprep.subr.mxu0 0.0
        %859 = vmatpush1.msra.mxu0 0.0
        %860 = vmatprep.subr.mxu0 0.0
        %861 = vmatpush1.msra.mxu0 0.0
        %862 = vmatprep.subr.mxu0 0.0
        %863 = vmatpush1.msra.mxu0 0.0
        %864 = vmatprep.subr.mxu0 0.0
        %865 = vmatpush1.msra.mxu0 0.0
        %866 = vmatprep.mubr.f32.mxu0 0.0
        %867 = vmatmul.mubr.f32.gmra.mrb[0].mxu0 %v795
        %v868 = vpop.f32.mrb[0].mxu0
        %v869 = vadd.f32 %v287, %v868
        %v870 = vpop.f32.mrb[0].mxu0
        %v871 = vadd.f32 %v291, %v870
        %872 = vdwg.mxu0
        %873 = vmatprep.subr.mxu0 0.0
        %874 = vmatpush1.msra.mxu0 %v232
        %875 = vmatprep.subr.mxu0 0.0
        %876 = vmatpush1.msra.mxu0 %v235
        %877 = vmatprep.subr.mxu0 0.0
        %878 = vmatpush1.msra.mxu0 %v238
        %879 = vmatprep.subr.mxu0 0.0
        %880 = vmatpush1.msra.mxu0 %v241
        %881 = vmatprep.subr.mxu0 0.0
        %882 = vmatpush1.msra.mxu0 %v244
        %883 = vmatprep.subr.mxu0 0.0
        %884 = vmatpush1.msra.mxu0 %v247
        %885 = vmatprep.subr.mxu0 0.0
        %886 = vmatpush1.msra.mxu0 %v250
        %887 = vmatprep.subr.mxu0 0.0
        %888 = vmatpush1.msra.mxu0 %v253
        %889 = vmatprep.subr.mxu0 0.0
        %890 = vmatpush1.msra.mxu0 %v256
        %891 = vmatprep.subr.mxu0 0.0
        %892 = vmatpush1.msra.mxu0 %v259
        %893 = vmatprep.subr.mxu0 0.0
        %894 = vmatpush1.msra.mxu0 %v262
        %895 = vmatprep.subr.mxu0 0.0
        %896 = vmatpush1.msra.mxu0 %v265
        %897 = vmatprep.subr.mxu0 0.0
        %898 = vmatpush1.msra.mxu0 %v268
        %899 = vmatprep.subr.mxu0 0.0
        %900 = vmatpush1.msra.mxu0 %v271
        %901 = vmatprep.subr.mxu0 0.0
        %902 = vmatpush1.msra.mxu0 %v274
        %903 = vmatprep.subr.mxu0 0.0
        %904 = vmatpush1.msra.mxu0 %v277
        %905 = vmatprep.subr.mxu0 0.0
        %906 = vmatpush1.msra.mxu0 0.0
        %907 = vmatprep.subr.mxu0 0.0
        %908 = vmatpush1.msra.mxu0 0.0
        %909 = vmatprep.subr.mxu0 0.0
        %910 = vmatpush1.msra.mxu0 0.0
        %911 = vmatprep.subr.mxu0 0.0
        %912 = vmatpush1.msra.mxu0 0.0
        %913 = vmatprep.subr.mxu0 0.0
        %914 = vmatpush1.msra.mxu0 0.0
        %915 = vmatprep.subr.mxu0 0.0
        %916 = vmatpush1.msra.mxu0 0.0
        %917 = vmatprep.subr.mxu0 0.0
        %918 = vmatpush1.msra.mxu0 0.0
        %919 = vmatprep.subr.mxu0 0.0
        %920 = vmatpush1.msra.mxu0 0.0
        %921 = vmatprep.subr.mxu0 0.0
        %922 = vmatpush1.msra.mxu0 0.0
        %923 = vmatprep.subr.mxu0 0.0
        %924 = vmatpush1.msra.mxu0 0.0
        %925 = vmatprep.subr.mxu0 0.0
        %926 = vmatpush1.msra.mxu0 0.0
        %927 = vmatprep.subr.mxu0 0.0
        %928 = vmatpush1.msra.mxu0 0.0
        %929 = vmatprep.subr.mxu0 0.0
        %930 = vmatpush1.msra.mxu0 0.0
        %931 = vmatprep.subr.mxu0 0.0
        %932 = vmatpush1.msra.mxu0 0.0
        %933 = vmatprep.subr.mxu0 0.0
        %934 = vmatpush1.msra.mxu0 0.0
        %935 = vmatprep.subr.mxu0 0.0
        %936 = vmatpush1.msra.mxu0 0.0
        %937 = vmatprep.mubr.f32.mxu0 0.0
        %938 = vmatmul.mubr.f32.gmra.mrb[0].mxu0 %v795
        %v939 = vpop.f32.mrb[0].mxu0
        %v940 = vadd.f32 %v295, %v939
        %v941 = vpop.f32.mrb[0].mxu0
        %942 = vdwg.mxu0
        %v943 = vadd.f32 %v799, %v869
        %v944 = vxor.u32 %v943, 2147483648
        %v945 = vmul.f32 %v944, 1.442695
        %v946 = vpow.pop %v945
        %v947 = vadd.f32 %v946, 1.0
        %v948 = vrcp.pop %v947
        %v949 = vmul.f32 1.0, %v948
        %v950 = vadd.f32 %v800, %v871
        %v951 = vxor.u32 %v950, 2147483648
        %v952 = vmul.f32 %v951, 1.442695
        %v953 = vpow.pop %v952
        %v954 = vadd.f32 %v953, 1.0
        %v955 = vrcp.pop %v954
        %v956 = vmul.f32 1.0, %v955
        %v957 = vmul.f32 %v949, %v940
        %v958 = vadd.f32 %v801, %v957
        %v959 = vtanh.pop %v958
        %v960 = vsub.f32 1.0, %v956
        %v961 = vmul.f32 %v960, %v959
        %v962 = vmul.f32 %v956, %v795
        %v963 = vadd.f32 %v961, %v962
        %s964 = scalar_lea.vmem %s222, 24 [#allocation8]
        %965 = vst [vmem:[%s964] sm:$0xff] %v963
        %s966 = scalar_lea.vmem %s196, 96 [#allocation3]
        %v967 = vld [vmem:[%s966] sm:$0xff]
        %v968 = vld [vmem:[%s966 + $0x8] sm:$0xff]
        %v969 = vld [vmem:[%s966 + $0x10] sm:$0xff]
        %970 = vmatprep.subr.mxu0 %v231
        %971 = vmatpush1.msra.mxu0 %v230
        %972 = vmatprep.subr.mxu0 %v234
        %973 = vmatpush1.msra.mxu0 %v233
        %974 = vmatprep.subr.mxu0 %v237
        %975 = vmatpush1.msra.mxu0 %v236
        %976 = vmatprep.subr.mxu0 %v240
        %977 = vmatpush1.msra.mxu0 %v239
        %978 = vmatprep.subr.mxu0 %v243
        %979 = vmatpush1.msra.mxu0 %v242
        %980 = vmatprep.subr.mxu0 %v246
        %981 = vmatpush1.msra.mxu0 %v245
        %982 = vmatprep.subr.mxu0 %v249
        %983 = vmatpush1.msra.mxu0 %v248
        %984 = vmatprep.subr.mxu0 %v252
        %985 = vmatpush1.msra.mxu0 %v251
        %986 = vmatprep.subr.mxu0 %v255
        %987 = vmatpush1.msra.mxu0 %v254
        %988 = vmatprep.subr.mxu0 %v258
        %989 = vmatpush1.msra.mxu0 %v257
        %990 = vmatprep.subr.mxu0 %v261
        %991 = vmatpush1.msra.mxu0 %v260
        %992 = vmatprep.subr.mxu0 %v264
        %993 = vmatpush1.msra.mxu0 %v263
        %994 = vmatprep.subr.mxu0 %v267
        %995 = vmatpush1.msra.mxu0 %v266
        %996 = vmatprep.subr.mxu0 %v270
        %997 = vmatpush1.msra.mxu0 %v269
        %998 = vmatprep.subr.mxu0 %v273
        %999 = vmatpush1.msra.mxu0 %v272
        %1000 = vmatprep.subr.mxu0 %v276
        %1001 = vmatpush1.msra.mxu0 %v275
        %1002 = vmatprep.subr.mxu0 0.0
        %1003 = vmatpush1.msra.mxu0 0.0
        %1004 = vmatprep.subr.mxu0 0.0
        %1005 = vmatpush1.msra.mxu0 0.0
        %1006 = vmatprep.subr.mxu0 0.0
        %1007 = vmatpush1.msra.mxu0 0.0
        %1008 = vmatprep.subr.mxu0 0.0
        %1009 = vmatpush1.msra.mxu0 0.0
        %1010 = vmatprep.subr.mxu0 0.0
        %1011 = vmatpush1.msra.mxu0 0.0
        %1012 = vmatprep.subr.mxu0 0.0
        %1013 = vmatpush1.msra.mxu0 0.0
        %1014 = vmatprep.subr.mxu0 0.0
        %1015 = vmatpush1.msra.mxu0 0.0
        %1016 = vmatprep.subr.mxu0 0.0
        %1017 = vmatpush1.msra.mxu0 0.0
        %1018 = vmatprep.subr.mxu0 0.0
        %1019 = vmatpush1.msra.mxu0 0.0
        %1020 = vmatprep.subr.mxu0 0.0
        %1021 = vmatpush1.msra.mxu0 0.0
        %1022 = vmatprep.subr.mxu0 0.0
        %1023 = vmatpush1.msra.mxu0 0.0
        %1024 = vmatprep.subr.mxu0 0.0
        %1025 = vmatpush1.msra.mxu0 0.0
        %1026 = vmatprep.subr.mxu0 0.0
        %1027 = vmatpush1.msra.mxu0 0.0
        %1028 = vmatprep.subr.mxu0 0.0
        %1029 = vmatpush1.msra.mxu0 0.0
        %1030 = vmatprep.subr.mxu0 0.0
        %1031 = vmatpush1.msra.mxu0 0.0
        %1032 = vmatprep.subr.mxu0 0.0
        %1033 = vmatpush1.msra.mxu0 0.0
        %1034 = vmatprep.mubr.f32.mxu0 0.0
        %1035 = vmatmul.mubr.f32.gmra.mrb[0].mxu0 %v963
        %v1036 = vpop.f32.mrb[0].mxu0
        %v1037 = vadd.f32 %v287, %v1036
        %v1038 = vpop.f32.mrb[0].mxu0
        %v1039 = vadd.f32 %v291, %v1038
        %1040 = vdwg.mxu0
        %1041 = vmatprep.subr.mxu0 0.0
        %1042 = vmatpush1.msra.mxu0 %v232
        %1043 = vmatprep.subr.mxu0 0.0
        %1044 = vmatpush1.msra.mxu0 %v235
        %1045 = vmatprep.subr.mxu0 0.0
        %1046 = vmatpush1.msra.mxu0 %v238
        %1047 = vmatprep.subr.mxu0 0.0
        %1048 = vmatpush1.msra.mxu0 %v241
        %1049 = vmatprep.subr.mxu0 0.0
        %1050 = vmatpush1.msra.mxu0 %v244
        %1051 = vmatprep.subr.mxu0 0.0
        %1052 = vmatpush1.msra.mxu0 %v247
        %1053 = vmatprep.subr.mxu0 0.0
        %1054 = vmatpush1.msra.mxu0 %v250
        %1055 = vmatprep.subr.mxu0 0.0
        %1056 = vmatpush1.msra.mxu0 %v253
        %1057 = vmatprep.subr.mxu0 0.0
        %1058 = vmatpush1.msra.mxu0 %v256
        %1059 = vmatprep.subr.mxu0 0.0
        %1060 = vmatpush1.msra.mxu0 %v259
        %1061 = vmatprep.subr.mxu0 0.0
        %1062 = vmatpush1.msra.mxu0 %v262
        %1063 = vmatprep.subr.mxu0 0.0
        %1064 = vmatpush1.msra.mxu0 %v265
        %1065 = vmatprep.subr.mxu0 0.0
        %1066 = vmatpush1.msra.mxu0 %v268
        %1067 = vmatprep.subr.mxu0 0.0
        %1068 = vmatpush1.msra.mxu0 %v271
        %1069 = vmatprep.subr.mxu0 0.0
        %1070 = vmatpush1.msra.mxu0 %v274
        %1071 = vmatprep.subr.mxu0 0.0
        %1072 = vmatpush1.msra.mxu0 %v277
        %1073 = vmatprep.subr.mxu0 0.0
        %1074 = vmatpush1.msra.mxu0 0.0
        %1075 = vmatprep.subr.mxu0 0.0
        %1076 = vmatpush1.msra.mxu0 0.0
        %1077 = vmatprep.subr.mxu0 0.0
        %1078 = vmatpush1.msra.mxu0 0.0
        %1079 = vmatprep.subr.mxu0 0.0
        %1080 = vmatpush1.msra.mxu0 0.0
        %1081 = vmatprep.subr.mxu0 0.0
        %1082 = vmatpush1.msra.mxu0 0.0
        %1083 = vmatprep.subr.mxu0 0.0
        %1084 = vmatpush1.msra.mxu0 0.0
        %1085 = vmatprep.subr.mxu0 0.0
        %1086 = vmatpush1.msra.mxu0 0.0
        %1087 = vmatprep.subr.mxu0 0.0
        %1088 = vmatpush1.msra.mxu0 0.0
        %1089 = vmatprep.subr.mxu0 0.0
        %1090 = vmatpush1.msra.mxu0 0.0
        %1091 = vmatprep.subr.mxu0 0.0
        %1092 = vmatpush1.msra.mxu0 0.0
        %1093 = vmatprep.subr.mxu0 0.0
        %1094 = vmatpush1.msra.mxu0 0.0
        %1095 = vmatprep.subr.mxu0 0.0
        %1096 = vmatpush1.msra.mxu0 0.0
        %1097 = vmatprep.subr.mxu0 0.0
        %1098 = vmatpush1.msra.mxu0 0.0
        %1099 = vmatprep.subr.mxu0 0.0
        %1100 = vmatpush1.msra.mxu0 0.0
        %1101 = vmatprep.subr.mxu0 0.0
        %1102 = vmatpush1.msra.mxu0 0.0
        %1103 = vmatprep.subr.mxu0 0.0
        %1104 = vmatpush1.msra.mxu0 0.0
        %1105 = vmatprep.mubr.f32.mxu0 0.0
        %1106 = vmatmul.mubr.f32.gmra.mrb[0].mxu0 %v963
        %v1107 = vpop.f32.mrb[0].mxu0
        %v1108 = vadd.f32 %v295, %v1107
        %v1109 = vpop.f32.mrb[0].mxu0
        %1110 = vdwg.mxu0
        %v1111 = vadd.f32 %v967, %v1037
        %v1112 = vxor.u32 %v1111, 2147483648
        %v1113 = vmul.f32 %v1112, 1.442695
        %v1114 = vpow.pop %v1113
        %v1115 = vadd.f32 %v1114, 1.0
        %v1116 = vrcp.pop %v1115
        %v1117 = vmul.f32 1.0, %v1116
        %v1118 = vadd.f32 %v968, %v1039
        %v1119 = vxor.u32 %v1118, 2147483648
        %v1120 = vmul.f32 %v1119, 1.442695
        %v1121 = vpow.pop %v1120
        %v1122 = vadd.f32 %v1121, 1.0
        %v1123 = vrcp.pop %v1122
        %v1124 = vmul.f32 1.0, %v1123
        %v1125 = vmul.f32 %v1117, %v1108
        %v1126 = vadd.f32 %v969, %v1125
        %v1127 = vtanh.pop %v1126
        %v1128 = vsub.f32 1.0, %v1124
        %v1129 = vmul.f32 %v1128, %v1127
        %v1130 = vmul.f32 %v1124, %v963
        %v1131 = vadd.f32 %v1129, %v1130
        %s1132 = scalar_lea.vmem %s222, 32 [#allocation8]
        %1133 = vst [vmem:[%s1132] sm:$0xff] %v1131
        %s1134 = scalar_lea.vmem %s196, 120 [#allocation3]
        %v1135 = vld [vmem:[%s1134] sm:$0xff]
        %v1136 = vld [vmem:[%s1134 + $0x8] sm:$0xff]
        %v1137 = vld [vmem:[%s1134 + $0x10] sm:$0xff]
        %1138 = vmatprep.subr.mxu0 %v231
        %1139 = vmatpush1.msra.mxu0 %v230
        %1140 = vmatprep.subr.mxu0 %v234
        %1141 = vmatpush1.msra.mxu0 %v233
        %1142 = vmatprep.subr.mxu0 %v237
        %1143 = vmatpush1.msra.mxu0 %v236
        %1144 = vmatprep.subr.mxu0 %v240
        %1145 = vmatpush1.msra.mxu0 %v239
        %1146 = vmatprep.subr.mxu0 %v243
        %1147 = vmatpush1.msra.mxu0 %v242
        %1148 = vmatprep.subr.mxu0 %v246
        %1149 = vmatpush1.msra.mxu0 %v245
        %1150 = vmatprep.subr.mxu0 %v249
        %1151 = vmatpush1.msra.mxu0 %v248
        %1152 = vmatprep.subr.mxu0 %v252
        %1153 = vmatpush1.msra.mxu0 %v251
        %1154 = vmatprep.subr.mxu0 %v255
        %1155 = vmatpush1.msra.mxu0 %v254
        %1156 = vmatprep.subr.mxu0 %v258
        %1157 = vmatpush1.msra.mxu0 %v257
        %1158 = vmatprep.subr.mxu0 %v261
        %1159 = vmatpush1.msra.mxu0 %v260
        %1160 = vmatprep.subr.mxu0 %v264
        %1161 = vmatpush1.msra.mxu0 %v263
        %1162 = vmatprep.subr.mxu0 %v267
        %1163 = vmatpush1.msra.mxu0 %v266
        %1164 = vmatprep.subr.mxu0 %v270
        %1165 = vmatpush1.msra.mxu0 %v269
        %1166 = vmatprep.subr.mxu0 %v273
        %1167 = vmatpush1.msra.mxu0 %v272
        %1168 = vmatprep.subr.mxu0 %v276
        %1169 = vmatpush1.msra.mxu0 %v275
        %1170 = vmatprep.subr.mxu0 0.0
        %1171 = vmatpush1.msra.mxu0 0.0
        %1172 = vmatprep.subr.mxu0 0.0
        %1173 = vmatpush1.msra.mxu0 0.0
        %1174 = vmatprep.subr.mxu0 0.0
        %1175 = vmatpush1.msra.mxu0 0.0
        %1176 = vmatprep.subr.mxu0 0.0
        %1177 = vmatpush1.msra.mxu0 0.0
        %1178 = vmatprep.subr.mxu0 0.0
        %1179 = vmatpush1.msra.mxu0 0.0
        %1180 = vmatprep.subr.mxu0 0.0
        %1181 = vmatpush1.msra.mxu0 0.0
        %1182 = vmatprep.subr.mxu0 0.0
        %1183 = vmatpush1.msra.mxu0 0.0
        %1184 = vmatprep.subr.mxu0 0.0
        %1185 = vmatpush1.msra.mxu0 0.0
        %1186 = vmatprep.subr.mxu0 0.0
        %1187 = vmatpush1.msra.mxu0 0.0
        %1188 = vmatprep.subr.mxu0 0.0
        %1189 = vmatpush1.msra.mxu0 0.0
        %1190 = vmatprep.subr.mxu0 0.0
        %1191 = vmatpush1.msra.mxu0 0.0
        %1192 = vmatprep.subr.mxu0 0.0
        %1193 = vmatpush1.msra.mxu0 0.0
        %1194 = vmatprep.subr.mxu0 0.0
        %1195 = vmatpush1.msra.mxu0 0.0
        %1196 = vmatprep.subr.mxu0 0.0
        %1197 = vmatpush1.msra.mxu0 0.0
        %1198 = vmatprep.subr.mxu0 0.0
        %1199 = vmatpush1.msra.mxu0 0.0
        %1200 = vmatprep.subr.mxu0 0.0
        %1201 = vmatpush1.msra.mxu0 0.0
        %1202 = vmatprep.mubr.f32.mxu0 0.0
        %1203 = vmatmul.mubr.f32.gmra.mrb[0].mxu0 %v1131
        %v1204 = vpop.f32.mrb[0].mxu0
        %v1205 = vadd.f32 %v287, %v1204
        %v1206 = vpop.f32.mrb[0].mxu0
        %v1207 = vadd.f32 %v291, %v1206
        %1208 = vdwg.mxu0
        %1209 = vmatprep.subr.mxu0 0.0
        %1210 = vmatpush1.msra.mxu0 %v232
        %1211 = vmatprep.subr.mxu0 0.0
        %1212 = vmatpush1.msra.mxu0 %v235
        %1213 = vmatprep.subr.mxu0 0.0
        %1214 = vmatpush1.msra.mxu0 %v238
        %1215 = vmatprep.subr.mxu0 0.0
        %1216 = vmatpush1.msra.mxu0 %v241
        %1217 = vmatprep.subr.mxu0 0.0
        %1218 = vmatpush1.msra.mxu0 %v244
        %1219 = vmatprep.subr.mxu0 0.0
        %1220 = vmatpush1.msra.mxu0 %v247
        %1221 = vmatprep.subr.mxu0 0.0
        %1222 = vmatpush1.msra.mxu0 %v250
        %1223 = vmatprep.subr.mxu0 0.0
        %1224 = vmatpush1.msra.mxu0 %v253
        %1225 = vmatprep.subr.mxu0 0.0
        %1226 = vmatpush1.msra.mxu0 %v256
        %1227 = vmatprep.subr.mxu0 0.0
        %1228 = vmatpush1.msra.mxu0 %v259
        %1229 = vmatprep.subr.mxu0 0.0
        %1230 = vmatpush1.msra.mxu0 %v262
        %1231 = vmatprep.subr.mxu0 0.0
        %1232 = vmatpush1.msra.mxu0 %v265
        %1233 = vmatprep.subr.mxu0 0.0
        %1234 = vmatpush1.msra.mxu0 %v268
        %1235 = vmatprep.subr.mxu0 0.0
        %1236 = vmatpush1.msra.mxu0 %v271
        %1237 = vmatprep.subr.mxu0 0.0
        %1238 = vmatpush1.msra.mxu0 %v274
        %1239 = vmatprep.subr.mxu0 0.0
        %1240 = vmatpush1.msra.mxu0 %v277
        %1241 = vmatprep.subr.mxu0 0.0
        %1242 = vmatpush1.msra.mxu0 0.0
        %1243 = vmatprep.subr.mxu0 0.0
        %1244 = vmatpush1.msra.mxu0 0.0
        %1245 = vmatprep.subr.mxu0 0.0
        %1246 = vmatpush1.msra.mxu0 0.0
        %1247 = vmatprep.subr.mxu0 0.0
        %1248 = vmatpush1.msra.mxu0 0.0
        %1249 = vmatprep.subr.mxu0 0.0
        %1250 = vmatpush1.msra.mxu0 0.0
        %1251 = vmatprep.subr.mxu0 0.0
        %1252 = vmatpush1.msra.mxu0 0.0
        %1253 = vmatprep.subr.mxu0 0.0
        %1254 = vmatpush1.msra.mxu0 0.0
        %1255 = vmatprep.subr.mxu0 0.0
        %1256 = vmatpush1.msra.mxu0 0.0
        %1257 = vmatprep.subr.mxu0 0.0
        %1258 = vmatpush1.msra.mxu0 0.0
        %1259 = vmatprep.subr.mxu0 0.0
        %1260 = vmatpush1.msra.mxu0 0.0
        %1261 = vmatprep.subr.mxu0 0.0
        %1262 = vmatpush1.msra.mxu0 0.0
        %1263 = vmatprep.subr.mxu0 0.0
        %1264 = vmatpush1.msra.mxu0 0.0
        %1265 = vmatprep.subr.mxu0 0.0
        %1266 = vmatpush1.msra.mxu0 0.0
        %1267 = vmatprep.subr.mxu0 0.0
        %1268 = vmatpush1.msra.mxu0 0.0
        %1269 = vmatprep.subr.mxu0 0.0
        %1270 = vmatpush1.msra.mxu0 0.0
        %1271 = vmatprep.subr.mxu0 0.0
        %1272 = vmatpush1.msra.mxu0 0.0
        %1273 = vmatprep.mubr.f32.mxu0 0.0
        %1274 = vmatmul.mubr.f32.gmra.mrb[0].mxu0 %v1131
        %v1275 = vpop.f32.mrb[0].mxu0
        %v1276 = vadd.f32 %v295, %v1275
        %v1277 = vpop.f32.mrb[0].mxu0
        %1278 = vdwg.mxu0
        %v1279 = vadd.f32 %v1135, %v1205
        %v1280 = vxor.u32 %v1279, 2147483648
        %v1281 = vmul.f32 %v1280, 1.442695
        %v1282 = vpow.pop %v1281
        %v1283 = vadd.f32 %v1282, 1.0
        %v1284 = vrcp.pop %v1283
        %v1285 = vmul.f32 1.0, %v1284
        %v1286 = vadd.f32 %v1136, %v1207
        %v1287 = vxor.u32 %v1286, 2147483648
        %v1288 = vmul.f32 %v1287, 1.442695
        %v1289 = vpow.pop %v1288
        %v1290 = vadd.f32 %v1289, 1.0
        %v1291 = vrcp.pop %v1290
        %v1292 = vmul.f32 1.0, %v1291
        %v1293 = vmul.f32 %v1285, %v1276
        %v1294 = vadd.f32 %v1137, %v1293
        %v1295 = vtanh.pop %v1294
        %v1296 = vsub.f32 1.0, %v1292
        %v1297 = vmul.f32 %v1296, %v1295
        %v1298 = vmul.f32 %v1292, %v1131
        %v1299 = vadd.f32 %v1297, %v1298
        %s1300 = scalar_lea.vmem %s222, 40 [#allocation8]
        %1301 = vst [vmem:[%s1300] sm:$0xff] %v1299
        %s1302 = scalar_lea.vmem %s196, 144 [#allocation3]
        %v1303 = vld [vmem:[%s1302] sm:$0xff]
        %v1304 = vld [vmem:[%s1302 + $0x8] sm:$0xff]
        %v1305 = vld [vmem:[%s1302 + $0x10] sm:$0xff]
        %1306 = vmatprep.subr.mxu0 %v231
        %1307 = vmatpush1.msra.mxu0 %v230
        %1308 = vmatprep.subr.mxu0 %v234
        %1309 = vmatpush1.msra.mxu0 %v233
        %1310 = vmatprep.subr.mxu0 %v237
        %1311 = vmatpush1.msra.mxu0 %v236
        %1312 = vmatprep.subr.mxu0 %v240
        %1313 = vmatpush1.msra.mxu0 %v239
        %1314 = vmatprep.subr.mxu0 %v243
        %1315 = vmatpush1.msra.mxu0 %v242
        %1316 = vmatprep.subr.mxu0 %v246
        %1317 = vmatpush1.msra.mxu0 %v245
        %1318 = vmatprep.subr.mxu0 %v249
        %1319 = vmatpush1.msra.mxu0 %v248
        %1320 = vmatprep.subr.mxu0 %v252
        %1321 = vmatpush1.msra.mxu0 %v251
        %1322 = vmatprep.subr.mxu0 %v255
        %1323 = vmatpush1.msra.mxu0 %v254
        %1324 = vmatprep.subr.mxu0 %v258
        %1325 = vmatpush1.msra.mxu0 %v257
        %1326 = vmatprep.subr.mxu0 %v261
        %1327 = vmatpush1.msra.mxu0 %v260
        %1328 = vmatprep.subr.mxu0 %v264
        %1329 = vmatpush1.msra.mxu0 %v263
        %1330 = vmatprep.subr.mxu0 %v267
        %1331 = vmatpush1.msra.mxu0 %v266
        %1332 = vmatprep.subr.mxu0 %v270
        %1333 = vmatpush1.msra.mxu0 %v269
        %1334 = vmatprep.subr.mxu0 %v273
        %1335 = vmatpush1.msra.mxu0 %v272
        %1336 = vmatprep.subr.mxu0 %v276
        %1337 = vmatpush1.msra.mxu0 %v275
        %1338 = vmatprep.subr.mxu0 0.0
        %1339 = vmatpush1.msra.mxu0 0.0
        %1340 = vmatprep.subr.mxu0 0.0
        %1341 = vmatpush1.msra.mxu0 0.0
        %1342 = vmatprep.subr.mxu0 0.0
        %1343 = vmatpush1.msra.mxu0 0.0
        %1344 = vmatprep.subr.mxu0 0.0
        %1345 = vmatpush1.msra.mxu0 0.0
        %1346 = vmatprep.subr.mxu0 0.0
        %1347 = vmatpush1.msra.mxu0 0.0
        %1348 = vmatprep.subr.mxu0 0.0
        %1349 = vmatpush1.msra.mxu0 0.0
        %1350 = vmatprep.subr.mxu0 0.0
        %1351 = vmatpush1.msra.mxu0 0.0
        %1352 = vmatprep.subr.mxu0 0.0
        %1353 = vmatpush1.msra.mxu0 0.0
        %1354 = vmatprep.subr.mxu0 0.0
        %1355 = vmatpush1.msra.mxu0 0.0
        %1356 = vmatprep.subr.mxu0 0.0
        %1357 = vmatpush1.msra.mxu0 0.0
        %1358 = vmatprep.subr.mxu0 0.0
        %1359 = vmatpush1.msra.mxu0 0.0
        %1360 = vmatprep.subr.mxu0 0.0
        %1361 = vmatpush1.msra.mxu0 0.0
        %1362 = vmatprep.subr.mxu0 0.0
        %1363 = vmatpush1.msra.mxu0 0.0
        %1364 = vmatprep.subr.mxu0 0.0
        %1365 = vmatpush1.msra.mxu0 0.0
        %1366 = vmatprep.subr.mxu0 0.0
        %1367 = vmatpush1.msra.mxu0 0.0
        %1368 = vmatprep.subr.mxu0 0.0
        %1369 = vmatpush1.msra.mxu0 0.0
        %1370 = vmatprep.mubr.f32.mxu0 0.0
        %1371 = vmatmul.mubr.f32.gmra.mrb[0].mxu0 %v1299
        %v1372 = vpop.f32.mrb[0].mxu0
        %v1373 = vadd.f32 %v287, %v1372
        %v1374 = vpop.f32.mrb[0].mxu0
        %v1375 = vadd.f32 %v291, %v1374
        %1376 = vdwg.mxu0
        %1377 = vmatprep.subr.mxu0 0.0
        %1378 = vmatpush1.msra.mxu0 %v232
        %1379 = vmatprep.subr.mxu0 0.0
        %1380 = vmatpush1.msra.mxu0 %v235
        %1381 = vmatprep.subr.mxu0 0.0
        %1382 = vmatpush1.msra.mxu0 %v238
        %1383 = vmatprep.subr.mxu0 0.0
        %1384 = vmatpush1.msra.mxu0 %v241
        %1385 = vmatprep.subr.mxu0 0.0
        %1386 = vmatpush1.msra.mxu0 %v244
        %1387 = vmatprep.subr.mxu0 0.0
        %1388 = vmatpush1.msra.mxu0 %v247
        %1389 = vmatprep.subr.mxu0 0.0
        %1390 = vmatpush1.msra.mxu0 %v250
        %1391 = vmatprep.subr.mxu0 0.0
        %1392 = vmatpush1.msra.mxu0 %v253
        %1393 = vmatprep.subr.mxu0 0.0
        %1394 = vmatpush1.msra.mxu0 %v256
        %1395 = vmatprep.subr.mxu0 0.0
        %1396 = vmatpush1.msra.mxu0 %v259
        %1397 = vmatprep.subr.mxu0 0.0
        %1398 = vmatpush1.msra.mxu0 %v262
        %1399 = vmatprep.subr.mxu0 0.0
        %1400 = vmatpush1.msra.mxu0 %v265
        %1401 = vmatprep.subr.mxu0 0.0
        %1402 = vmatpush1.msra.mxu0 %v268
        %1403 = vmatprep.subr.mxu0 0.0
        %1404 = vmatpush1.msra.mxu0 %v271
        %1405 = vmatprep.subr.mxu0 0.0
        %1406 = vmatpush1.msra.mxu0 %v274
        %1407 = vmatprep.subr.mxu0 0.0
        %1408 = vmatpush1.msra.mxu0 %v277
        %1409 = vmatprep.subr.mxu0 0.0
        %1410 = vmatpush1.msra.mxu0 0.0
        %1411 = vmatprep.subr.mxu0 0.0
        %1412 = vmatpush1.msra.mxu0 0.0
        %1413 = vmatprep.subr.mxu0 0.0
        %1414 = vmatpush1.msra.mxu0 0.0
        %1415 = vmatprep.subr.mxu0 0.0
        %1416 = vmatpush1.msra.mxu0 0.0
        %1417 = vmatprep.subr.mxu0 0.0
        %1418 = vmatpush1.msra.mxu0 0.0
        %1419 = vmatprep.subr.mxu0 0.0
        %1420 = vmatpush1.msra.mxu0 0.0
        %1421 = vmatprep.subr.mxu0 0.0
        %1422 = vmatpush1.msra.mxu0 0.0
        %1423 = vmatprep.subr.mxu0 0.0
        %1424 = vmatpush1.msra.mxu0 0.0
        %1425 = vmatprep.subr.mxu0 0.0
        %1426 = vmatpush1.msra.mxu0 0.0
        %1427 = vmatprep.subr.mxu0 0.0
        %1428 = vmatpush1.msra.mxu0 0.0
        %1429 = vmatprep.subr.mxu0 0.0
        %1430 = vmatpush1.msra.mxu0 0.0
        %1431 = vmatprep.subr.mxu0 0.0
        %1432 = vmatpush1.msra.mxu0 0.0
        %1433 = vmatprep.subr.mxu0 0.0
        %1434 = vmatpush1.msra.mxu0 0.0
        %1435 = vmatprep.subr.mxu0 0.0
        %1436 = vmatpush1.msra.mxu0 0.0
        %1437 = vmatprep.subr.mxu0 0.0
        %1438 = vmatpush1.msra.mxu0 0.0
        %1439 = vmatprep.subr.mxu0 0.0
        %1440 = vmatpush1.msra.mxu0 0.0
        %1441 = vmatprep.mubr.f32.mxu0 0.0
        %1442 = vmatmul.mubr.f32.gmra.mrb[0].mxu0 %v1299
        %v1443 = vpop.f32.mrb[0].mxu0
        %v1444 = vadd.f32 %v295, %v1443
        %v1445 = vpop.f32.mrb[0].mxu0
        %1446 = vdwg.mxu0
        %v1447 = vadd.f32 %v1303, %v1373
        %v1448 = vxor.u32 %v1447, 2147483648
        %v1449 = vmul.f32 %v1448, 1.442695
        %v1450 = vpow.pop %v1449
        %v1451 = vadd.f32 %v1450, 1.0
        %v1452 = vrcp.pop %v1451
        %v1453 = vmul.f32 1.0, %v1452
        %v1454 = vadd.f32 %v1304, %v1375
        %v1455 = vxor.u32 %v1454, 2147483648
        %v1456 = vmul.f32 %v1455, 1.442695
        %v1457 = vpow.pop %v1456
        %v1458 = vadd.f32 %v1457, 1.0
        %v1459 = vrcp.pop %v1458
        %v1460 = vmul.f32 1.0, %v1459
        %v1461 = vmul.f32 %v1453, %v1444
        %v1462 = vadd.f32 %v1305, %v1461
        %v1463 = vtanh.pop %v1462
        %v1464 = vsub.f32 1.0, %v1460
        %v1465 = vmul.f32 %v1464, %v1463
        %v1466 = vmul.f32 %v1460, %v1299
        %v1467 = vadd.f32 %v1465, %v1466
        %s1468 = scalar_lea.vmem %s222, 48 [#allocation8]
        %1469 = vst [vmem:[%s1468] sm:$0xff] %v1467
        %s1470 = scalar_lea.vmem %s196, 168 [#allocation3]
        %v1471 = vld [vmem:[%s1470] sm:$0xff]
        %v1472 = vld [vmem:[%s1470 + $0x8] sm:$0xff]
        %v1473 = vld [vmem:[%s1470 + $0x10] sm:$0xff]
        %1474 = vmatprep.subr.mxu0 %v231
        %1475 = vmatpush1.msra.mxu0 %v230
        %1476 = vmatprep.subr.mxu0 %v234
        %1477 = vmatpush1.msra.mxu0 %v233
        %1478 = vmatprep.subr.mxu0 %v237
        %1479 = vmatpush1.msra.mxu0 %v236
        %1480 = vmatprep.subr.mxu0 %v240
        %1481 = vmatpush1.msra.mxu0 %v239
        %1482 = vmatprep.subr.mxu0 %v243
        %1483 = vmatpush1.msra.mxu0 %v242
        %1484 = vmatprep.subr.mxu0 %v246
        %1485 = vmatpush1.msra.mxu0 %v245
        %1486 = vmatprep.subr.mxu0 %v249
        %1487 = vmatpush1.msra.mxu0 %v248
        %1488 = vmatprep.subr.mxu0 %v252
        %1489 = vmatpush1.msra.mxu0 %v251
        %1490 = vmatprep.subr.mxu0 %v255
        %1491 = vmatpush1.msra.mxu0 %v254
        %1492 = vmatprep.subr.mxu0 %v258
        %1493 = vmatpush1.msra.mxu0 %v257
        %1494 = vmatprep.subr.mxu0 %v261
        %1495 = vmatpush1.msra.mxu0 %v260
        %1496 = vmatprep.subr.mxu0 %v264
        %1497 = vmatpush1.msra.mxu0 %v263
        %1498 = vmatprep.subr.mxu0 %v267
        %1499 = vmatpush1.msra.mxu0 %v266
        %1500 = vmatprep.subr.mxu0 %v270
        %1501 = vmatpush1.msra.mxu0 %v269
        %1502 = vmatprep.subr.mxu0 %v273
        %1503 = vmatpush1.msra.mxu0 %v272
        %1504 = vmatprep.subr.mxu0 %v276
        %1505 = vmatpush1.msra.mxu0 %v275
        %1506 = vmatprep.subr.mxu0 0.0
        %1507 = vmatpush1.msra.mxu0 0.0
        %1508 = vmatprep.subr.mxu0 0.0
        %1509 = vmatpush1.msra.mxu0 0.0
        %1510 = vmatprep.subr.mxu0 0.0
        %1511 = vmatpush1.msra.mxu0 0.0
        %1512 = vmatprep.subr.mxu0 0.0
        %1513 = vmatpush1.msra.mxu0 0.0
        %1514 = vmatprep.subr.mxu0 0.0
        %1515 = vmatpush1.msra.mxu0 0.0
        %1516 = vmatprep.subr.mxu0 0.0
        %1517 = vmatpush1.msra.mxu0 0.0
        %1518 = vmatprep.subr.mxu0 0.0
        %1519 = vmatpush1.msra.mxu0 0.0
        %1520 = vmatprep.subr.mxu0 0.0
        %1521 = vmatpush1.msra.mxu0 0.0
        %1522 = vmatprep.subr.mxu0 0.0
        %1523 = vmatpush1.msra.mxu0 0.0
        %1524 = vmatprep.subr.mxu0 0.0
        %1525 = vmatpush1.msra.mxu0 0.0
        %1526 = vmatprep.subr.mxu0 0.0
        %1527 = vmatpush1.msra.mxu0 0.0
        %1528 = vmatprep.subr.mxu0 0.0
        %1529 = vmatpush1.msra.mxu0 0.0
        %1530 = vmatprep.subr.mxu0 0.0
        %1531 = vmatpush1.msra.mxu0 0.0
        %1532 = vmatprep.subr.mxu0 0.0
        %1533 = vmatpush1.msra.mxu0 0.0
        %1534 = vmatprep.subr.mxu0 0.0
        %1535 = vmatpush1.msra.mxu0 0.0
        %1536 = vmatprep.subr.mxu0 0.0
        %1537 = vmatpush1.msra.mxu0 0.0
        %1538 = vmatprep.mubr.f32.mxu0 0.0
        %1539 = vmatmul.mubr.f32.gmra.mrb[0].mxu0 %v1467
        %v1540 = vpop.f32.mrb[0].mxu0
        %v1541 = vadd.f32 %v287, %v1540
        %v1542 = vpop.f32.mrb[0].mxu0
        %v1543 = vadd.f32 %v291, %v1542
        %1544 = vdwg.mxu0
        %1545 = vmatprep.subr.mxu0 0.0
        %1546 = vmatpush1.msra.mxu0 %v232
        %1547 = vmatprep.subr.mxu0 0.0
        %1548 = vmatpush1.msra.mxu0 %v235
        %1549 = vmatprep.subr.mxu0 0.0
        %1550 = vmatpush1.msra.mxu0 %v238
        %1551 = vmatprep.subr.mxu0 0.0
        %1552 = vmatpush1.msra.mxu0 %v241
        %1553 = vmatprep.subr.mxu0 0.0
        %1554 = vmatpush1.msra.mxu0 %v244
        %1555 = vmatprep.subr.mxu0 0.0
        %1556 = vmatpush1.msra.mxu0 %v247
        %1557 = vmatprep.subr.mxu0 0.0
        %1558 = vmatpush1.msra.mxu0 %v250
        %1559 = vmatprep.subr.mxu0 0.0
        %1560 = vmatpush1.msra.mxu0 %v253
        %1561 = vmatprep.subr.mxu0 0.0
        %1562 = vmatpush1.msra.mxu0 %v256
        %1563 = vmatprep.subr.mxu0 0.0
        %1564 = vmatpush1.msra.mxu0 %v259
        %1565 = vmatprep.subr.mxu0 0.0
        %1566 = vmatpush1.msra.mxu0 %v262
        %1567 = vmatprep.subr.mxu0 0.0
        %1568 = vmatpush1.msra.mxu0 %v265
        %1569 = vmatprep.subr.mxu0 0.0
        %1570 = vmatpush1.msra.mxu0 %v268
        %1571 = vmatprep.subr.mxu0 0.0
        %1572 = vmatpush1.msra.mxu0 %v271
        %1573 = vmatprep.subr.mxu0 0.0
        %1574 = vmatpush1.msra.mxu0 %v274
        %1575 = vmatprep.subr.mxu0 0.0
        %1576 = vmatpush1.msra.mxu0 %v277
        %1577 = vmatprep.subr.mxu0 0.0
        %1578 = vmatpush1.msra.mxu0 0.0
        %1579 = vmatprep.subr.mxu0 0.0
        %1580 = vmatpush1.msra.mxu0 0.0
        %1581 = vmatprep.subr.mxu0 0.0
        %1582 = vmatpush1.msra.mxu0 0.0
        %1583 = vmatprep.subr.mxu0 0.0
        %1584 = vmatpush1.msra.mxu0 0.0
        %1585 = vmatprep.subr.mxu0 0.0
        %1586 = vmatpush1.msra.mxu0 0.0
        %1587 = vmatprep.subr.mxu0 0.0
        %1588 = vmatpush1.msra.mxu0 0.0
        %1589 = vmatprep.subr.mxu0 0.0
        %1590 = vmatpush1.msra.mxu0 0.0
        %1591 = vmatprep.subr.mxu0 0.0
        %1592 = vmatpush1.msra.mxu0 0.0
        %1593 = vmatprep.subr.mxu0 0.0
        %1594 = vmatpush1.msra.mxu0 0.0
        %1595 = vmatprep.subr.mxu0 0.0
        %1596 = vmatpush1.msra.mxu0 0.0
        %1597 = vmatprep.subr.mxu0 0.0
        %1598 = vmatpush1.msra.mxu0 0.0
        %1599 = vmatprep.subr.mxu0 0.0
        %1600 = vmatpush1.msra.mxu0 0.0
        %1601 = vmatprep.subr.mxu0 0.0
        %1602 = vmatpush1.msra.mxu0 0.0
        %1603 = vmatprep.subr.mxu0 0.0
        %1604 = vmatpush1.msra.mxu0 0.0
        %1605 = vmatprep.subr.mxu0 0.0
        %1606 = vmatpush1.msra.mxu0 0.0
        %1607 = vmatprep.subr.mxu0 0.0
        %1608 = vmatpush1.msra.mxu0 0.0
        %1609 = vmatprep.mubr.f32.mxu0 0.0
        %1610 = vmatmul.mubr.f32.gmra.mrb[0].mxu0 %v1467
        %v1611 = vpop.f32.mrb[0].mxu0
        %v1612 = vadd.f32 %v295, %v1611
        %v1613 = vpop.f32.mrb[0].mxu0
        %1614 = vdwg.mxu0
        %v1615 = vadd.f32 %v1471, %v1541
        %v1616 = vxor.u32 %v1615, 2147483648
        %v1617 = vmul.f32 %v1616, 1.442695
        %v1618 = vpow.pop %v1617
        %v1619 = vadd.f32 %v1618, 1.0
        %v1620 = vrcp.pop %v1619
        %v1621 = vmul.f32 1.0, %v1620
        %v1622 = vadd.f32 %v1472, %v1543
        %v1623 = vxor.u32 %v1622, 2147483648
        %v1624 = vmul.f32 %v1623, 1.442695
        %v1625 = vpow.pop %v1624
        %v1626 = vadd.f32 %v1625, 1.0
        %v1627 = vrcp.pop %v1626
        %v1628 = vmul.f32 1.0, %v1627
        %v1629 = vmul.f32 %v1621, %v1612
        %v1630 = vadd.f32 %v1473, %v1629
        %v1631 = vtanh.pop %v1630
        %v1632 = vsub.f32 1.0, %v1628
        %v1633 = vmul.f32 %v1632, %v1631
        %v1634 = vmul.f32 %v1628, %v1467
        %v1635 = vadd.f32 %v1633, %v1634
        %s1636 = scalar_lea.vmem %s222, 56 [#allocation8]
        %1637 = vst [vmem:[%s1636] sm:$0xff] %v1635
        %1638 = vst [vmem:[#allocation2] sm:$0xff] %v1635
        %s1639 = sand.u32 %s113, 1
        %s1640 = scalar_lea.sflag [#allocation5], %s1639
        %s1641 = sand.u32 %s113, 1
        %s1642 = smul.addr %s1641, 64
        %s1643 = scalar_lea.vmem [#allocation8], %s1642
        // Predicated region
        $region45: #{tpu_custom_call.1} parent=31 // pred_check
          %p1644 = pneg %p123
        $region46: #{tpu_custom_call.1} parent=31 // pred_check_branch
          %1646 = sbr.rel (%p1644) target = $region48
        $region47: #{tpu_custom_call.1} parent=31 // pred_region
          %s1647 = smul.u32 8, %s26
          %s1649 = ssub.s32 1024, 1024
          %1650 = vsyncadd %s1640, %s1649
          %s1651 = sadd.s32 %s25, %s1647
          %s1652 = smul.addr %s1651, 128
          %s1653 = scalar_lea.hbm %s3, %s1652
          %s1654 = sshll.u32 %s1643, 4
          %s1655 = int_to_ptr.vmem [resolvable:$true] %s1654
          %1660 = dma.vmem_to_hbm [thread:$0]  %s1655, 1024, %s1653, %s1640, 128, 128, 8
        $region48: #{tpu_custom_call.1} parent=31 // pred_fallthru
          _
      $region32: #{tpu_custom_call.1} parent=5 // pred_fallthru
        _
      %p1661 = scmp.le.s32.totalorder 2, %s16
      // Predicated region
      $region49: #{tpu_custom_call.1} parent=5 // pred_check
        %p1662 = pneg %p1661
      $region50: #{tpu_custom_call.1} parent=5 // pred_check_branch
        %1664 = sbr.rel (%p1662) target = $region52
      $region51: #{tpu_custom_call.1} parent=5 // pred_region
        %s1665 = ssub.s32 %s16, 2
        // Predicated region
        $region53: #{tpu_custom_call.1} parent=51 // pred_check
          %p1666 = pneg %p129
        $region54: #{tpu_custom_call.1} parent=51 // pred_check_branch
          %1668 = sbr.rel (%p1666) target = $region56
        $region55: #{tpu_custom_call.1} parent=51 // pred_region
          %s1669 = sand.u32 %s114, 1
          %s1670 = scalar_lea.sflag [#allocation5], %s1669
          %s1671 = sand.u32 %s114, 1
          %s1672 = smul.addr %s1671, 64
          %s1673 = scalar_lea.vmem [#allocation8], %s1672
          %1674 = dma.done %s1670, 1024
        $region56: #{tpu_custom_call.1} parent=51 // pred_fallthru
          _
      $region52: #{tpu_custom_call.1} parent=5 // pred_fallthru
        _
    $region6: #{tpu_custom_call.1} parent=1 // loop_footer
      %s20 = sadd.s32 1, %s16
    $region7: #{tpu_custom_call.1} parent=1 // loop_footer_branch
      %15 = sbr.rel target = $region3
    $region8: #{tpu_custom_call.1} parent=1 // loop_exit
      _
    %1675 = vsyncpa [#allocation4], 1
    %s1676 = scalar_lea.sflag [#allocation4], 1
    %1677 = vsyncpa %s1676, 1
    %1678 = vsyncpa [#allocation7], 1
    %1679 = vsyncpa [#allocation5], 1
    %s1680 = scalar_lea.sflag [#allocation5], 1
    %1681 = vsyncpa %s1680, 1

</llo_original>
